<compile_context>
chip_gen: v7x
topology: tpu7x:2x2x1
jax: 0.10.0
libtpu: 0.0.40
codegen_flags: <defaults>
</compile_context>

<pallas_src>
import functools

import jax
import jax.numpy as jnp
from jax import lax
from jax.experimental import pallas as pl
from jax.experimental.pallas import tpu as pltpu


def gnn_kernel(xt_ref, adjt_ref, wt_ref, g_ref, b_ref, wot_ref, bo_ref,
               out_ref, *, nlayer, eps):
    # Feature-major: every activation is [f, R] (R = B*t*n fills all 128 lanes).
    x = xt_ref[...].astype(jnp.float32)                # [f, R]
    rows = x.shape[1]
    inv_rows = jnp.float32(1.0 / rows)
    # Hoisted once; reused by every layer's BN reductions on the MXU.
    ones_col = jnp.ones((rows, 1), jnp.float32)        # [R, 1]

    prev = x
    for l in range(nlayer):
        # GCNConv (bias=False since bn=True):  h^T = (W^T @ x^T) @ A_hat^T
        z = jnp.dot(wt_ref[l], x, preferred_element_type=jnp.float32)       # [f, R]
        # adjacency read straight from VMEM at each use (not hoisted).
        h = jnp.dot(z, adjt_ref[...], preferred_element_type=jnp.float32)   # [f, R]

        # BatchNorm1d batch statistics over all R rows (lane reduction on MXU),
        # two-pass (centered) variance like torch.
        s = jnp.dot(h, ones_col, preferred_element_type=jnp.float32)        # [f, 1]
        mean = s * inv_rows
        c = h - mean
        ss = jnp.dot(c * c, ones_col, preferred_element_type=jnp.float32)   # [f, 1]
        var = ss * inv_rows
        scale = g_ref[:, l:l + 1] * lax.rsqrt(var + eps)                    # [f, 1]
        hn = c * scale + b_ref[:, l:l + 1]                                  # [f, R]

        # ReLU; dropout(p=0.0) is a no-op; residual connection (res=True).
        x = jnp.maximum(hn, 0.0) + prev
        prev = x

    # output_encoder: out^T = W_out^T @ x^T + b_out  -> lane-dense [nout, R] store.
    out = jnp.dot(wot_ref[...], x, preferred_element_type=jnp.float32) + bo_ref[...]
    out_ref[...] = out.astype(out_ref.dtype)


def gnn_forward(x, adj_block, weights, gammas, betas, w_out, b_out, *, eps=1e-5):
    """x: [B, t, n, f]; adj_block: [R, R] block-diag normalized adjacency (R = B*t*n).

    weights: [L, f, f] (in, out) per GCN layer; gammas/betas: [L, f]; w_out: [f, nout];
    b_out: [nout].
    """
    B, T, n, f = x.shape
    nout = w_out.shape[1]
    R = B * T * n
    L = weights.shape[0]

    # Feature-major operands (tiny one-time XLA relayouts outside the kernel).
    xt = x.reshape(R, f).T                    # [f, R]
    adj_t = adj_block.T                       # [R, R]  A_hat^T (== A_hat for GCN norm)
    w_t = jnp.swapaxes(weights, 1, 2)         # [L, f, f]  (out, in)
    g_t = gammas.T                            # [f, L]
    b_t = betas.T                             # [f, L]
    wo_t = w_out.T                            # [nout, f]
    bo_col = b_out.reshape(nout, 1)           # [nout, 1]

    flops = L * (2 * R * f * f + 2 * R * R * f + 4 * R * f) + 2 * R * f * nout
    bytes_accessed = 4 * (R * f + R * R + L * f * f + 2 * L * f
                          + f * nout + nout + R * nout)

    kernel = functools.partial(gnn_kernel, nlayer=L, eps=eps)
    out_t = pl.pallas_call(
        kernel,
        out_shape=jax.ShapeDtypeStruct((nout, R), x.dtype),
        in_specs=[pl.BlockSpec(memory_space=pltpu.MemorySpace.VMEM)] * 7,
        out_specs=pl.BlockSpec(memory_space=pltpu.MemorySpace.VMEM),
        compiler_params=pltpu.CompilerParams(vmem_limit_bytes=32 * 1024 * 1024),
        cost_estimate=pl.CostEstimate(flops=flops, transcendentals=L * f,
                                      bytes_accessed=bytes_accessed),
    )(xt, adj_t, w_t, g_t, b_t, wo_t, bo_col)
    return out_t.T.reshape(B, T, n, nout)     # small wrapper-side relayout


def build_norm_adj(edge_index, n):
    """Dense equivalent of PyG gcn_norm: D^{-1/2}(A + I)D^{-1/2}, A[dst, src]."""
    src, dst = edge_index
    A = jnp.zeros((n, n), jnp.float32).at[dst, src].add(1.0)
    # add self loops only where missing (avoids double-counting existing loops)
    needs_loop = (jnp.diag(A) == 0).astype(jnp.float32)
    A_hat = A + jnp.diag(needs_loop)
    deg = A_hat.sum(axis=1)
    dinv = 1.0 / jnp.sqrt(deg)
    return A_hat * dinv[:, None] * dinv[None, :]


def build_block_adj(adj_norm, num_copies):
    """I_{B*t} (x) A_hat: applies A_hat independently to each of the B*t graph copies."""
    return jnp.kron(jnp.eye(num_copies, dtype=adj_norm.dtype), adj_norm)


def reference_forward(x, adj_norm, weights, gammas, betas, w_out, b_out, eps=1e-5):
    hp = lax.Precision.HIGHEST
    B, T, n, f = x.shape
    h = x.reshape(B * T, n, f)
    prev = h
    for l in range(weights.shape[0]):
        z = jnp.einsum('gnf,fk->gnk', h, weights[l], precision=hp)
        z = jnp.einsum('ij,gjk->gik', adj_norm, z, precision=hp)
        mean = jnp.mean(z, axis=(0, 1), keepdims=True)
        var = jnp.mean((z - mean) ** 2, axis=(0, 1), keepdims=True)
        z = (z - mean) / jnp.sqrt(var + eps) * gammas[l] + betas[l]
        h = jnp.maximum(z, 0.0) + prev
        prev = h
    o = jnp.einsum('gnf,fo->gno', h, w_out, precision=hp) + b_out
    return o.reshape(B, T, n, -1)


if __name__ == "__main__":
    B, T, n, f, nout = 2, 4, 16, 32, 16
    nlayer_gnn = 3

    key = jax.random.PRNGKey(0)
    k_x, k_w, k_g, k_b, k_wo, k_bo = jax.random.split(key, 6)

    x = jax.random.normal(k_x, (B, T, n, f), dtype=jnp.float32)

    # symmetric ring graph on n nodes (deterministic, no duplicate edges)
    idx = jnp.arange(n)
    src = jnp.concatenate([idx, idx])
    dst = jnp.concatenate([(idx + 1) % n, (idx - 1) % n])
    edge_index = jnp.stack([src, dst]).astype(jnp.int32)   # [2, 2n]
    adj_norm = build_norm_adj(edge_index, n)
    # precomputed once (graph + B*t are static); wrapper then only does free relayouts
    adj_block = build_block_adj(adj_norm, B * T)            # [B*T*n, B*T*n] = [128, 128]

    # deterministic synthetic parameters
    weights = 0.1 * jax.random.normal(k_w, (nlayer_gnn, f, f), jnp.float32)  # GCN lin (in,out)
    gammas = 1.0 + 0.01 * jax.random.normal(k_g, (nlayer_gnn, f), jnp.float32)
    betas = 0.01 * jax.random.normal(k_b, (nlayer_gnn, f), jnp.float32)
    w_out = 0.1 * jax.random.normal(k_wo, (f, nout), jnp.float32)
    b_out = 0.1 * jax.random.normal(k_bo, (nout,), jnp.float32)

    out = gnn_forward(x, adj_block, weights, gammas, betas, w_out, b_out)
    out = jax.block_until_ready(out)

    ref = reference_forward(x, adj_norm, weights, gammas, betas, w_out, b_out)
    assert out.shape == (B, T, n, nout)
    assert jnp.allclose(out, ref, atol=2e-3, rtol=2e-3), float(jnp.max(jnp.abs(out - ref)))

    print("KERNEL_OK")
</pallas_src>

<mosaic_0001>
module attributes {stable_mosaic.version = 11 : i64} {
  func.func @gnn_kernel(%arg0: memref<32x128xf32, #tpu.memory_space<vmem>>, %arg1: memref<128x128xf32, #tpu.memory_space<vmem>>, %arg2: memref<3x32x32xf32, #tpu.memory_space<vmem>>, %arg3: memref<32x3xf32, #tpu.memory_space<vmem>>, %arg4: memref<32x3xf32, #tpu.memory_space<vmem>>, %arg5: memref<16x32xf32, #tpu.memory_space<vmem>>, %arg6: memref<16x1xf32, #tpu.memory_space<vmem>>, %arg7: memref<16x128xf32, #tpu.memory_space<vmem>>) attributes {dimension_semantics = [], scalar_prefetch = 0 : i64, scratch_operands = 0 : i64, tpu.core_type = #tpu.core_type<tc>} {
    %c0 = arith.constant 0 : index
    %c0_0 = arith.constant 0 : index
    %0 = vector.load %arg0[%c0, %c0_0] : memref<32x128xf32, #tpu.memory_space<vmem>>, vector<32x128xf32>
    %cst = arith.constant 1.000000e+00 : f32
    %1 = vector.broadcast %cst : f32 to vector<128x1xf32>
    %c0_1 = arith.constant 0 : index
    %c0_2 = arith.constant 0 : index
    %c0_3 = arith.constant 0 : index
    %2 = vector.load %arg2[%c0_1, %c0_2, %c0_3] : memref<3x32x32xf32, #tpu.memory_space<vmem>>, vector<1x32x32xf32>
    %3 = vector.shape_cast %2 : vector<1x32x32xf32> to vector<32x32xf32>
    %cst_4 = arith.constant dense<0.000000e+00> : vector<32x128xf32>
    %4 = tpu.matmul %3, %0, %cst_4 {dimension_numbers = #tpu.dot_dimension_numbers<[1], [0], [0], [1], [0, 0, 1, 1], [], []>} : vector<32x32xf32>, vector<32x128xf32>, vector<32x128xf32> -> vector<32x128xf32>
    %c0_5 = arith.constant 0 : index
    %c0_6 = arith.constant 0 : index
    %5 = vector.load %arg1[%c0_5, %c0_6] : memref<128x128xf32, #tpu.memory_space<vmem>>, vector<128x128xf32>
    %cst_7 = arith.constant dense<0.000000e+00> : vector<32x128xf32>
    %6 = tpu.matmul %4, %5, %cst_7 {dimension_numbers = #tpu.dot_dimension_numbers<[1], [0], [0], [1], [0, 0, 1, 1], [], []>} : vector<32x128xf32>, vector<128x128xf32>, vector<32x128xf32> -> vector<32x128xf32>
    %cst_8 = arith.constant dense<0.000000e+00> : vector<32x1xf32>
    %7 = tpu.matmul %6, %1, %cst_8 {dimension_numbers = #tpu.dot_dimension_numbers<[1], [0], [0], [1], [0, 0, 1, 1], [], []>} : vector<32x128xf32>, vector<128x1xf32>, vector<32x1xf32> -> vector<32x1xf32>
    %cst_9 = arith.constant 7.812500e-03 : f32
    %8 = vector.broadcast %cst_9 : f32 to vector<32x1xf32>
    %9 = arith.mulf %7, %8 : vector<32x1xf32>
    %10 = vector.broadcast %9 : vector<32x1xf32> to vector<32x128xf32>
    %11 = arith.subf %6, %10 : vector<32x128xf32>
    %12 = arith.mulf %11, %11 : vector<32x128xf32>
    %cst_10 = arith.constant dense<0.000000e+00> : vector<32x1xf32>
    %13 = tpu.matmul %12, %1, %cst_10 {dimension_numbers = #tpu.dot_dimension_numbers<[1], [0], [0], [1], [0, 0, 1, 1], [], []>} : vector<32x128xf32>, vector<128x1xf32>, vector<32x1xf32> -> vector<32x1xf32>
    %cst_11 = arith.constant 7.812500e-03 : f32
    %14 = vector.broadcast %cst_11 : f32 to vector<32x1xf32>
    %15 = arith.mulf %13, %14 : vector<32x1xf32>
    %c0_12 = arith.constant 0 : index
    %c0_13 = arith.constant 0 : index
    %16 = vector.load %arg3[%c0_12, %c0_13] : memref<32x3xf32, #tpu.memory_space<vmem>>, vector<32x1xf32>
    %cst_14 = arith.constant 9.99999974E-6 : f32
    %17 = vector.broadcast %cst_14 : f32 to vector<32x1xf32>
    %18 = arith.addf %15, %17 : vector<32x1xf32>
    %19 = math.rsqrt %18 : vector<32x1xf32>
    %20 = arith.mulf %16, %19 : vector<32x1xf32>
    %21 = vector.broadcast %20 : vector<32x1xf32> to vector<32x128xf32>
    %22 = arith.mulf %11, %21 : vector<32x128xf32>
    %c0_15 = arith.constant 0 : index
    %c0_16 = arith.constant 0 : index
    %23 = vector.load %arg4[%c0_15, %c0_16] : memref<32x3xf32, #tpu.memory_space<vmem>>, vector<32x1xf32>
    %24 = vector.broadcast %23 : vector<32x1xf32> to vector<32x128xf32>
    %25 = arith.addf %22, %24 : vector<32x128xf32>
    %cst_17 = arith.constant 0.000000e+00 : f32
    %26 = vector.broadcast %cst_17 : f32 to vector<32x128xf32>
    %27 = arith.maximumf %25, %26 : vector<32x128xf32>
    %28 = arith.addf %27, %0 : vector<32x128xf32>
    %c1 = arith.constant 1 : index
    %c0_18 = arith.constant 0 : index
    %c0_19 = arith.constant 0 : index
    %29 = vector.load %arg2[%c1, %c0_18, %c0_19] : memref<3x32x32xf32, #tpu.memory_space<vmem>>, vector<1x32x32xf32>
    %30 = vector.shape_cast %29 : vector<1x32x32xf32> to vector<32x32xf32>
    %cst_20 = arith.constant dense<0.000000e+00> : vector<32x128xf32>
    %31 = tpu.matmul %30, %28, %cst_20 {dimension_numbers = #tpu.dot_dimension_numbers<[1], [0], [0], [1], [0, 0, 1, 1], [], []>} : vector<32x32xf32>, vector<32x128xf32>, vector<32x128xf32> -> vector<32x128xf32>
    %c0_21 = arith.constant 0 : index
    %c0_22 = arith.constant 0 : index
    %32 = vector.load %arg1[%c0_21, %c0_22] : memref<128x128xf32, #tpu.memory_space<vmem>>, vector<128x128xf32>
    %cst_23 = arith.constant dense<0.000000e+00> : vector<32x128xf32>
    %33 = tpu.matmul %31, %32, %cst_23 {dimension_numbers = #tpu.dot_dimension_numbers<[1], [0], [0], [1], [0, 0, 1, 1], [], []>} : vector<32x128xf32>, vector<128x128xf32>, vector<32x128xf32> -> vector<32x128xf32>
    %cst_24 = arith.constant dense<0.000000e+00> : vector<32x1xf32>
    %34 = tpu.matmul %33, %1, %cst_24 {dimension_numbers = #tpu.dot_dimension_numbers<[1], [0], [0], [1], [0, 0, 1, 1], [], []>} : vector<32x128xf32>, vector<128x1xf32>, vector<32x1xf32> -> vector<32x1xf32>
    %cst_25 = arith.constant 7.812500e-03 : f32
    %35 = vector.broadcast %cst_25 : f32 to vector<32x1xf32>
    %36 = arith.mulf %34, %35 : vector<32x1xf32>
    %37 = vector.broadcast %36 : vector<32x1xf32> to vector<32x128xf32>
    %38 = arith.subf %33, %37 : vector<32x128xf32>
    %39 = arith.mulf %38, %38 : vector<32x128xf32>
    %cst_26 = arith.constant dense<0.000000e+00> : vector<32x1xf32>
    %40 = tpu.matmul %39, %1, %cst_26 {dimension_numbers = #tpu.dot_dimension_numbers<[1], [0], [0], [1], [0, 0, 1, 1], [], []>} : vector<32x128xf32>, vector<128x1xf32>, vector<32x1xf32> -> vector<32x1xf32>
    %cst_27 = arith.constant 7.812500e-03 : f32
    %41 = vector.broadcast %cst_27 : f32 to vector<32x1xf32>
    %42 = arith.mulf %40, %41 : vector<32x1xf32>
    %c0_28 = arith.constant 0 : index
    %c1_29 = arith.constant 1 : index
    %43 = vector.load %arg3[%c0_28, %c1_29] : memref<32x3xf32, #tpu.memory_space<vmem>>, vector<32x1xf32>
    %cst_30 = arith.constant 9.99999974E-6 : f32
    %44 = vector.broadcast %cst_30 : f32 to vector<32x1xf32>
    %45 = arith.addf %42, %44 : vector<32x1xf32>
    %46 = math.rsqrt %45 : vector<32x1xf32>
    %47 = arith.mulf %43, %46 : vector<32x1xf32>
    %48 = vector.broadcast %47 : vector<32x1xf32> to vector<32x128xf32>
    %49 = arith.mulf %38, %48 : vector<32x128xf32>
    %c0_31 = arith.constant 0 : index
    %c1_32 = arith.constant 1 : index
    %50 = vector.load %arg4[%c0_31, %c1_32] : memref<32x3xf32, #tpu.memory_space<vmem>>, vector<32x1xf32>
    %51 = vector.broadcast %50 : vector<32x1xf32> to vector<32x128xf32>
    %52 = arith.addf %49, %51 : vector<32x128xf32>
    %cst_33 = arith.constant 0.000000e+00 : f32
    %53 = vector.broadcast %cst_33 : f32 to vector<32x128xf32>
    %54 = arith.maximumf %52, %53 : vector<32x128xf32>
    %55 = arith.addf %54, %28 : vector<32x128xf32>
    %c2 = arith.constant 2 : index
    %c0_34 = arith.constant 0 : index
    %c0_35 = arith.constant 0 : index
    %56 = vector.load %arg2[%c2, %c0_34, %c0_35] : memref<3x32x32xf32, #tpu.memory_space<vmem>>, vector<1x32x32xf32>
    %57 = vector.shape_cast %56 : vector<1x32x32xf32> to vector<32x32xf32>
    %cst_36 = arith.constant dense<0.000000e+00> : vector<32x128xf32>
    %58 = tpu.matmul %57, %55, %cst_36 {dimension_numbers = #tpu.dot_dimension_numbers<[1], [0], [0], [1], [0, 0, 1, 1], [], []>} : vector<32x32xf32>, vector<32x128xf32>, vector<32x128xf32> -> vector<32x128xf32>
    %c0_37 = arith.constant 0 : index
    %c0_38 = arith.constant 0 : index
    %59 = vector.load %arg1[%c0_37, %c0_38] : memref<128x128xf32, #tpu.memory_space<vmem>>, vector<128x128xf32>
    %cst_39 = arith.constant dense<0.000000e+00> : vector<32x128xf32>
    %60 = tpu.matmul %58, %59, %cst_39 {dimension_numbers = #tpu.dot_dimension_numbers<[1], [0], [0], [1], [0, 0, 1, 1], [], []>} : vector<32x128xf32>, vector<128x128xf32>, vector<32x128xf32> -> vector<32x128xf32>
    %cst_40 = arith.constant dense<0.000000e+00> : vector<32x1xf32>
    %61 = tpu.matmul %60, %1, %cst_40 {dimension_numbers = #tpu.dot_dimension_numbers<[1], [0], [0], [1], [0, 0, 1, 1], [], []>} : vector<32x128xf32>, vector<128x1xf32>, vector<32x1xf32> -> vector<32x1xf32>
    %cst_41 = arith.constant 7.812500e-03 : f32
    %62 = vector.broadcast %cst_41 : f32 to vector<32x1xf32>
    %63 = arith.mulf %61, %62 : vector<32x1xf32>
    %64 = vector.broadcast %63 : vector<32x1xf32> to vector<32x128xf32>
    %65 = arith.subf %60, %64 : vector<32x128xf32>
    %66 = arith.mulf %65, %65 : vector<32x128xf32>
    %cst_42 = arith.constant dense<0.000000e+00> : vector<32x1xf32>
    %67 = tpu.matmul %66, %1, %cst_42 {dimension_numbers = #tpu.dot_dimension_numbers<[1], [0], [0], [1], [0, 0, 1, 1], [], []>} : vector<32x128xf32>, vector<128x1xf32>, vector<32x1xf32> -> vector<32x1xf32>
    %cst_43 = arith.constant 7.812500e-03 : f32
    %68 = vector.broadcast %cst_43 : f32 to vector<32x1xf32>
    %69 = arith.mulf %67, %68 : vector<32x1xf32>
    %c0_44 = arith.constant 0 : index
    %c2_45 = arith.constant 2 : index
    %70 = vector.load %arg3[%c0_44, %c2_45] : memref<32x3xf32, #tpu.memory_space<vmem>>, vector<32x1xf32>
    %cst_46 = arith.constant 9.99999974E-6 : f32
    %71 = vector.broadcast %cst_46 : f32 to vector<32x1xf32>
    %72 = arith.addf %69, %71 : vector<32x1xf32>
    %73 = math.rsqrt %72 : vector<32x1xf32>
    %74 = arith.mulf %70, %73 : vector<32x1xf32>
    %75 = vector.broadcast %74 : vector<32x1xf32> to vector<32x128xf32>
    %76 = arith.mulf %65, %75 : vector<32x128xf32>
    %c0_47 = arith.constant 0 : index
    %c2_48 = arith.constant 2 : index
    %77 = vector.load %arg4[%c0_47, %c2_48] : memref<32x3xf32, #tpu.memory_space<vmem>>, vector<32x1xf32>
    %78 = vector.broadcast %77 : vector<32x1xf32> to vector<32x128xf32>
    %79 = arith.addf %76, %78 : vector<32x128xf32>
    %cst_49 = arith.constant 0.000000e+00 : f32
    %80 = vector.broadcast %cst_49 : f32 to vector<32x128xf32>
    %81 = arith.maximumf %79, %80 : vector<32x128xf32>
    %82 = arith.addf %81, %55 : vector<32x128xf32>
    %c0_50 = arith.constant 0 : index
    %c0_51 = arith.constant 0 : index
    %83 = vector.load %arg5[%c0_50, %c0_51] : memref<16x32xf32, #tpu.memory_space<vmem>>, vector<16x32xf32>
    %cst_52 = arith.constant dense<0.000000e+00> : vector<16x128xf32>
    %84 = tpu.matmul %83, %82, %cst_52 {dimension_numbers = #tpu.dot_dimension_numbers<[1], [0], [0], [1], [0, 0, 1, 1], [], []>} : vector<16x32xf32>, vector<32x128xf32>, vector<16x128xf32> -> vector<16x128xf32>
    %c0_53 = arith.constant 0 : index
    %c0_54 = arith.constant 0 : index
    %85 = vector.load %arg6[%c0_53, %c0_54] : memref<16x1xf32, #tpu.memory_space<vmem>>, vector<16x1xf32>
    %86 = vector.broadcast %85 : vector<16x1xf32> to vector<16x128xf32>
    %87 = arith.addf %84, %86 : vector<16x128xf32>
    %c0_55 = arith.constant 0 : index
    %c0_56 = arith.constant 0 : index
    %88 = vector.load %arg7[%c0_55, %c0_56] : memref<16x128xf32, #tpu.memory_space<vmem>>, vector<16x128xf32>
    tpu.vector_store %arg7[%c0_55, %c0_56], %87 {strides = array<i32>} : memref<16x128xf32, #tpu.memory_space<vmem>>, vector<16x128xf32>,
    return
  }
}

</mosaic_0001>

<llo_original>
// kernel: tpu_custom_call.1
$region0: #{tpu_custom_call.1}
  #allocation0 [shape = 'u32[]', space=smem, size = 0x4, offset = 0x4, fixed_abs, tag = 'smem constant byte address 0x4 - core index']
  #allocation1 [shape = 'u32[144,128]{1,0:T(1,128)}', space=vmem, size = 0x12000, scoped, tag = 'internal scratch']
  %s0 = inlined_call_operand.hbm [shape: f32[32,128], index: 0, kind: input, shape index: {}]
  %s1 = inlined_call_operand.hbm [shape: f32[128,128], index: 1, kind: input, shape index: {}]
  %s2 = inlined_call_operand.vmem [shape: f32[3,32,32], index: 2, kind: input, shape index: {}]
  %s3 = inlined_call_operand.vmem [shape: f32[32,3], index: 3, kind: input, shape index: {}]
  %s4 = inlined_call_operand.vmem [shape: f32[32,3], index: 4, kind: input, shape index: {}]
  %s5 = inlined_call_operand.hbm [shape: f32[16,32], index: 5, kind: input, shape index: {}]
  %s6 = inlined_call_operand.vmem [shape: f32[16,1], index: 6, kind: input, shape index: {}]
  %s7 = inlined_call_operand.hbm [shape: f32[16,128], index: 7, kind: output, shape index: {}]
  %s8 = sld [smem:[#allocation0]]
  $region50: #{tpu_custom_call.1} parent=0
    _
  %s10 = ssub.s32 1, %s8
  %s11 = scalar_select 0, %s10, %s8
  $region1: #{tpu_custom_call.1} parent=0
    #allocation2 [shape = 'u8[16384]{0}', space=vmem, size = 0x4000, scoped, tag = 'input window, operand 0, single buffered']
    #allocation3 [shape = 's32[1]{0}', space=sflag, size = 0x4, scoped, tag = 'scoped memory for tpu_custom_call.1']
    #allocation4 [shape = 's32[1]{0}', space=sflag, size = 0x4, scoped, tag = 'scoped memory for tpu_custom_call.1']
    #allocation5 [shape = 'u8[65536]{0}', space=vmem, size = 0x10000, scoped, tag = 'input window, operand 1, single buffered']
    #allocation6 [shape = 's32[1]{0}', space=sflag, size = 0x4, scoped, tag = 'scoped memory for tpu_custom_call.1']
    #allocation7 [shape = 'u8[8192]{0}', space=vmem, size = 0x2000, scoped, tag = 'input window, operand 5, single buffered']
    #allocation8 [shape = 'u8[8192]{0}', space=vmem, size = 0x2000, scoped, tag = 'output window, operand 0, single buffered']
    %12 = vsyncpa [#allocation3], 0
    %13 = vsyncpa [#allocation6], 0
    %14 = vsyncpa [#allocation4], 0
    // Predicated region
    $region2: #{tpu_custom_call.1} parent=1 // pred_check
      _
    $region3: #{tpu_custom_call.1} parent=1 // pred_check_branch
      %16 = sbr.rel (0) target = $region5
    $region4: #{tpu_custom_call.1} parent=1 // pred_region
      %s18 = ssub.s32 512, 512
      %19 = vsyncadd [#allocation3], %s18
      %s20 = sshll.u32 [#allocation2], 4
      %s21 = int_to_ptr.vmem [resolvable:$true] %s20
      %26 = dma.hbm_to_vmem [thread:$0]  %s0, 512, %s21, [#allocation3], 128, 128, 8
    $region5: #{tpu_custom_call.1} parent=1 // pred_fallthru
      _
    // Predicated region
    $region6: #{tpu_custom_call.1} parent=1 // pred_check
      _
    $region7: #{tpu_custom_call.1} parent=1 // pred_check_branch
      %28 = sbr.rel (0) target = $region9
    $region8: #{tpu_custom_call.1} parent=1 // pred_region
      %s30 = ssub.s32 2048, 2048
      %31 = vsyncadd [#allocation6], %s30
      %s32 = sshll.u32 [#allocation5], 4
      %s33 = int_to_ptr.vmem [resolvable:$true] %s32
      %38 = dma.hbm_to_vmem [thread:$0]  %s1, 2048, %s33, [#allocation6], 128, 128, 8
    $region9: #{tpu_custom_call.1} parent=1 // pred_fallthru
      _
    // Predicated region
    $region10: #{tpu_custom_call.1} parent=1 // pred_check
      _
    $region11: #{tpu_custom_call.1} parent=1 // pred_check_branch
      %40 = sbr.rel (0) target = $region13
    $region12: #{tpu_custom_call.1} parent=1 // pred_region
      _
    $region13: #{tpu_custom_call.1} parent=1 // pred_fallthru
      _
    // Predicated region
    $region14: #{tpu_custom_call.1} parent=1 // pred_check
      _
    $region15: #{tpu_custom_call.1} parent=1 // pred_check_branch
      %42 = sbr.rel (0) target = $region17
    $region16: #{tpu_custom_call.1} parent=1 // pred_region
      _
    $region17: #{tpu_custom_call.1} parent=1 // pred_fallthru
      _
    // Predicated region
    $region18: #{tpu_custom_call.1} parent=1 // pred_check
      _
    $region19: #{tpu_custom_call.1} parent=1 // pred_check_branch
      %44 = sbr.rel (0) target = $region21
    $region20: #{tpu_custom_call.1} parent=1 // pred_region
      _
    $region21: #{tpu_custom_call.1} parent=1 // pred_fallthru
      _
    // Predicated region
    $region22: #{tpu_custom_call.1} parent=1 // pred_check
      _
    $region23: #{tpu_custom_call.1} parent=1 // pred_check_branch
      %46 = sbr.rel (0) target = $region25
    $region24: #{tpu_custom_call.1} parent=1 // pred_region
      %s48 = ssub.s32 256, 256
      %49 = vsyncadd [#allocation6], %s48
      %s50 = sshll.u32 [#allocation7], 4
      %s51 = int_to_ptr.vmem [resolvable:$true] %s50
      %56 = dma.hbm_to_vmem [thread:$0]  %s5, 256, %s51, [#allocation6], 128, 128, 8
    $region25: #{tpu_custom_call.1} parent=1 // pred_fallthru
      _
    // Predicated region
    $region26: #{tpu_custom_call.1} parent=1 // pred_check
      _
    $region27: #{tpu_custom_call.1} parent=1 // pred_check_branch
      %58 = sbr.rel (0) target = $region29
    $region28: #{tpu_custom_call.1} parent=1 // pred_region
      _
    $region29: #{tpu_custom_call.1} parent=1 // pred_fallthru
      _
    // Predicated region
    $region30: #{tpu_custom_call.1} parent=1 // pred_check
      _
    $region31: #{tpu_custom_call.1} parent=1 // pred_check_branch
      %60 = sbr.rel (0) target = $region33
    $region32: #{tpu_custom_call.1} parent=1 // pred_region
      %61 = dma.done [#allocation3], 512
    $region33: #{tpu_custom_call.1} parent=1 // pred_fallthru
      _
    // Predicated region
    $region34: #{tpu_custom_call.1} parent=1 // pred_check
      _
    $region35: #{tpu_custom_call.1} parent=1 // pred_check_branch
      %63 = sbr.rel (0) target = $region37
    $region36: #{tpu_custom_call.1} parent=1 // pred_region
      %64 = dma.done [#allocation6], 2048
    $region37: #{tpu_custom_call.1} parent=1 // pred_fallthru
      _
    // Predicated region
    $region38: #{tpu_custom_call.1} parent=1 // pred_check
      _
    $region39: #{tpu_custom_call.1} parent=1 // pred_check_branch
      %66 = sbr.rel (0) target = $region41
    $region40: #{tpu_custom_call.1} parent=1 // pred_region
      %67 = dma.done [#allocation6], 256
    $region41: #{tpu_custom_call.1} parent=1 // pred_fallthru
      _
    %v68 = vld [vmem:[#allocation2] sm:$0xff]
    %v69 = vld [vmem:[#allocation2 + $0x8] sm:$0xff]
    %v70 = vld [vmem:[#allocation2 + $0x10] sm:$0xff]
    %v71 = vld [vmem:[#allocation2 + $0x18] sm:$0xff]
    %v72 = vld [vmem:[%s2] sm:$0xff]
    %v73 = vld [vmem:[%s2 + $0x8] sm:$0xff]
    %v74 = vld [vmem:[%s2 + $0x10] sm:$0xff]
    %v75 = vld [vmem:[%s2 + $0x18] sm:$0xff]
    %vm76 = vcmask 261120
    %v78 = vsel %vm76, %v72, 0
    %v81 = vsel %vm76, %v73, 0
    %v84 = vsel %vm76, %v74, 0
    %v87 = vsel %vm76, %v75, 0
    %89 = vmatprep.subr.mxu0 0.0
    %90 = vmatpush1.msra.mxu0 %v68
    %91 = vmatprep.subr.mxu0 0.0
    %92 = vmatpush1.msra.mxu0 %v69
    %93 = vmatprep.subr.mxu0 0.0
    %94 = vmatpush1.msra.mxu0 %v70
    %95 = vmatprep.subr.mxu0 0.0
    %96 = vmatpush1.msra.mxu0 %v71
    %97 = vmatprep.subr.mxu0 0.0
    %98 = vmatpush1.msra.mxu0 0.0
    %99 = vmatprep.subr.mxu0 0.0
    %100 = vmatpush1.msra.mxu0 0.0
    %101 = vmatprep.subr.mxu0 0.0
    %102 = vmatpush1.msra.mxu0 0.0
    %103 = vmatprep.subr.mxu0 0.0
    %104 = vmatpush1.msra.mxu0 0.0
    %105 = vmatprep.subr.mxu0 0.0
    %106 = vmatpush1.msra.mxu0 0.0
    %107 = vmatprep.subr.mxu0 0.0
    %108 = vmatpush1.msra.mxu0 0.0
    %109 = vmatprep.subr.mxu0 0.0
    %110 = vmatpush1.msra.mxu0 0.0
    %111 = vmatprep.subr.mxu0 0.0
    %112 = vmatpush1.msra.mxu0 0.0
    %113 = vmatprep.subr.mxu0 0.0
    %114 = vmatpush1.msra.mxu0 0.0
    %115 = vmatprep.subr.mxu0 0.0
    %116 = vmatpush1.msra.mxu0 0.0
    %117 = vmatprep.subr.mxu0 0.0
    %118 = vmatpush1.msra.mxu0 0.0
    %119 = vmatprep.subr.mxu0 0.0
    %120 = vmatpush1.msra.mxu0 0.0
    %121 = vmatprep.subr.mxu0 0.0
    %122 = vmatpush1.msra.mxu0 0.0
    %123 = vmatprep.subr.mxu0 0.0
    %124 = vmatpush1.msra.mxu0 0.0
    %125 = vmatprep.subr.mxu0 0.0
    %126 = vmatpush1.msra.mxu0 0.0
    %127 = vmatprep.subr.mxu0 0.0
    %128 = vmatpush1.msra.mxu0 0.0
    %129 = vmatprep.subr.mxu0 0.0
    %130 = vmatpush1.msra.mxu0 0.0
    %131 = vmatprep.subr.mxu0 0.0
    %132 = vmatpush1.msra.mxu0 0.0
    %133 = vmatprep.subr.mxu0 0.0
    %134 = vmatpush1.msra.mxu0 0.0
    %135 = vmatprep.subr.mxu0 0.0
    %136 = vmatpush1.msra.mxu0 0.0
    %137 = vmatprep.subr.mxu0 0.0
    %138 = vmatpush1.msra.mxu0 0.0
    %139 = vmatprep.subr.mxu0 0.0
    %140 = vmatpush1.msra.mxu0 0.0
    %141 = vmatprep.subr.mxu0 0.0
    %142 = vmatpush1.msra.mxu0 0.0
    %143 = vmatprep.subr.mxu0 0.0
    %144 = vmatpush1.msra.mxu0 0.0
    %145 = vmatprep.subr.mxu0 0.0
    %146 = vmatpush1.msra.mxu0 0.0
    %147 = vmatprep.subr.mxu0 0.0
    %148 = vmatpush1.msra.mxu0 0.0
    %149 = vmatprep.subr.mxu0 0.0
    %150 = vmatpush1.msra.mxu0 0.0
    %151 = vmatprep.subr.mxu0 0.0
    %152 = vmatpush1.msra.mxu0 0.0
    %153 = vmatprep.mubr.f32.mxu0 0.0
    %154 = vmatmul.mubr.f32.gmra.mrb[0].mxu0 %v78
    %v155 = vpop.f32.mrb[0].mxu0
    %v156 = vadd.f32 0.0, %v155
    %v157 = vpop.f32.mrb[0].mxu0
    %158 = vmatprep.mubr.f32.mxu0 0.0
    %159 = vmatmul.mubr.f32.gmra.mrb[0].mxu0 %v81
    %v160 = vpop.f32.mrb[0].mxu0
    %v161 = vadd.f32 0.0, %v160
    %v162 = vpop.f32.mrb[0].mxu0
    %163 = vmatprep.mubr.f32.mxu0 0.0
    %164 = vmatmul.mubr.f32.gmra.mrb[0].mxu0 %v84
    %v165 = vpop.f32.mrb[0].mxu0
    %v166 = vadd.f32 0.0, %v165
    %v167 = vpop.f32.mrb[0].mxu0
    %168 = vmatprep.mubr.f32.mxu0 0.0
    %169 = vmatmul.mubr.f32.gmra.mrb[0].mxu0 %v87
    %v170 = vpop.f32.mrb[0].mxu0
    %v171 = vadd.f32 0.0, %v170
    %v172 = vpop.f32.mrb[0].mxu0
    %173 = vdwg.mxu0
    %v174 = vld [vmem:[#allocation5] sm:$0xff]
    %v175 = vld [vmem:[#allocation5 + $0x8] sm:$0xff]
    %v176 = vld [vmem:[#allocation5 + $0x10] sm:$0xff]
    %v177 = vld [vmem:[#allocation5 + $0x18] sm:$0xff]
    %v178 = vld [vmem:[#allocation5 + $0x20] sm:$0xff]
    %v179 = vld [vmem:[#allocation5 + $0x28] sm:$0xff]
    %v180 = vld [vmem:[#allocation5 + $0x30] sm:$0xff]
    %v181 = vld [vmem:[#allocation5 + $0x38] sm:$0xff]
    %v182 = vld [vmem:[#allocation5 + $0x40] sm:$0xff]
    %v183 = vld [vmem:[#allocation5 + $0x48] sm:$0xff]
    %v184 = vld [vmem:[#allocation5 + $0x50] sm:$0xff]
    %v185 = vld [vmem:[#allocation5 + $0x58] sm:$0xff]
    %v186 = vld [vmem:[#allocation5 + $0x60] sm:$0xff]
    %v187 = vld [vmem:[#allocation5 + $0x68] sm:$0xff]
    %v188 = vld [vmem:[#allocation5 + $0x70] sm:$0xff]
    %v189 = vld [vmem:[#allocation5 + $0x78] sm:$0xff]
    %190 = vmatprep.subr.mxu0 0.0
    %191 = vmatpush1.msra.mxu0 %v174
    %192 = vmatprep.subr.mxu0 0.0
    %193 = vmatpush1.msra.mxu0 %v175
    %194 = vmatprep.subr.mxu0 0.0
    %195 = vmatpush1.msra.mxu0 %v176
    %196 = vmatprep.subr.mxu0 0.0
    %197 = vmatpush1.msra.mxu0 %v177
    %198 = vmatprep.subr.mxu0 0.0
    %199 = vmatpush1.msra.mxu0 %v178
    %200 = vmatprep.subr.mxu0 0.0
    %201 = vmatpush1.msra.mxu0 %v179
    %202 = vmatprep.subr.mxu0 0.0
    %203 = vmatpush1.msra.mxu0 %v180
    %204 = vmatprep.subr.mxu0 0.0
    %205 = vmatpush1.msra.mxu0 %v181
    %206 = vmatprep.subr.mxu0 0.0
    %207 = vmatpush1.msra.mxu0 %v182
    %208 = vmatprep.subr.mxu0 0.0
    %209 = vmatpush1.msra.mxu0 %v183
    %210 = vmatprep.subr.mxu0 0.0
    %211 = vmatpush1.msra.mxu0 %v184
    %212 = vmatprep.subr.mxu0 0.0
    %213 = vmatpush1.msra.mxu0 %v185
    %214 = vmatprep.subr.mxu0 0.0
    %215 = vmatpush1.msra.mxu0 %v186
    %216 = vmatprep.subr.mxu0 0.0
    %217 = vmatpush1.msra.mxu0 %v187
    %218 = vmatprep.subr.mxu0 0.0
    %219 = vmatpush1.msra.mxu0 %v188
    %220 = vmatprep.subr.mxu0 0.0
    %221 = vmatpush1.msra.mxu0 %v189
    %222 = vmatprep.subr.mxu0 0.0
    %223 = vmatpush1.msra.mxu0 0.0
    %224 = vmatprep.subr.mxu0 0.0
    %225 = vmatpush1.msra.mxu0 0.0
    %226 = vmatprep.subr.mxu0 0.0
    %227 = vmatpush1.msra.mxu0 0.0
    %228 = vmatprep.subr.mxu0 0.0
    %229 = vmatpush1.msra.mxu0 0.0
    %230 = vmatprep.subr.mxu0 0.0
    %231 = vmatpush1.msra.mxu0 0.0
    %232 = vmatprep.subr.mxu0 0.0
    %233 = vmatpush1.msra.mxu0 0.0
    %234 = vmatprep.subr.mxu0 0.0
    %235 = vmatpush1.msra.mxu0 0.0
    %236 = vmatprep.subr.mxu0 0.0
    %237 = vmatpush1.msra.mxu0 0.0
    %238 = vmatprep.subr.mxu0 0.0
    %239 = vmatpush1.msra.mxu0 0.0
    %240 = vmatprep.subr.mxu0 0.0
    %241 = vmatpush1.msra.mxu0 0.0
    %242 = vmatprep.subr.mxu0 0.0
    %243 = vmatpush1.msra.mxu0 0.0
    %244 = vmatprep.subr.mxu0 0.0
    %245 = vmatpush1.msra.mxu0 0.0
    %246 = vmatprep.subr.mxu0 0.0
    %247 = vmatpush1.msra.mxu0 0.0
    %248 = vmatprep.subr.mxu0 0.0
    %249 = vmatpush1.msra.mxu0 0.0
    %250 = vmatprep.subr.mxu0 0.0
    %251 = vmatpush1.msra.mxu0 0.0
    %252 = vmatprep.subr.mxu0 0.0
    %253 = vmatpush1.msra.mxu0 0.0
    %254 = vmatprep.mubr.f32.mxu0 0.0
    %255 = vmatmul.mubr.f32.gmra.mrb[0].mxu0 %v156
    %v256 = vpop.f32.mrb[0].mxu0
    %v257 = vadd.f32 0.0, %v256
    %v258 = vpop.f32.mrb[0].mxu0
    %259 = vmatprep.mubr.f32.mxu0 0.0
    %260 = vmatmul.mubr.f32.gmra.mrb[0].mxu0 %v161
    %v261 = vpop.f32.mrb[0].mxu0
    %v262 = vadd.f32 0.0, %v261
    %v263 = vpop.f32.mrb[0].mxu0
    %264 = vmatprep.mubr.f32.mxu0 0.0
    %265 = vmatmul.mubr.f32.gmra.mrb[0].mxu0 %v166
    %v266 = vpop.f32.mrb[0].mxu0
    %v267 = vadd.f32 0.0, %v266
    %v268 = vpop.f32.mrb[0].mxu0
    %269 = vmatprep.mubr.f32.mxu0 0.0
    %270 = vmatmul.mubr.f32.gmra.mrb[0].mxu0 %v171
    %v271 = vpop.f32.mrb[0].mxu0
    %v272 = vadd.f32 0.0, %v271
    %v273 = vpop.f32.mrb[0].mxu0
    %274 = vdwg.mxu0
    %275 = vmatprep.subr.mxu0 0.0
    %276 = vmatpush1.msra.mxu0 1.0
    %277 = vmatprep.subr.mxu0 0.0
    %278 = vmatpush1.msra.mxu0 1.0
    %279 = vmatprep.subr.mxu0 0.0
    %280 = vmatpush1.msra.mxu0 1.0
    %281 = vmatprep.subr.mxu0 0.0
    %282 = vmatpush1.msra.mxu0 1.0
    %283 = vmatprep.subr.mxu0 0.0
    %284 = vmatpush1.msra.mxu0 1.0
    %285 = vmatprep.subr.mxu0 0.0
    %286 = vmatpush1.msra.mxu0 1.0
    %287 = vmatprep.subr.mxu0 0.0
    %288 = vmatpush1.msra.mxu0 1.0
    %289 = vmatprep.subr.mxu0 0.0
    %290 = vmatpush1.msra.mxu0 1.0
    %291 = vmatprep.subr.mxu0 0.0
    %292 = vmatpush1.msra.mxu0 1.0
    %293 = vmatprep.subr.mxu0 0.0
    %294 = vmatpush1.msra.mxu0 1.0
    %295 = vmatprep.subr.mxu0 0.0
    %296 = vmatpush1.msra.mxu0 1.0
    %297 = vmatprep.subr.mxu0 0.0
    %298 = vmatpush1.msra.mxu0 1.0
    %299 = vmatprep.subr.mxu0 0.0
    %300 = vmatpush1.msra.mxu0 1.0
    %301 = vmatprep.subr.mxu0 0.0
    %302 = vmatpush1.msra.mxu0 1.0
    %303 = vmatprep.subr.mxu0 0.0
    %304 = vmatpush1.msra.mxu0 1.0
    %305 = vmatprep.subr.mxu0 0.0
    %306 = vmatpush1.msra.mxu0 1.0
    %307 = vmatprep.subr.mxu0 0.0
    %308 = vmatpush1.msra.mxu0 0.0
    %309 = vmatprep.subr.mxu0 0.0
    %310 = vmatpush1.msra.mxu0 0.0
    %311 = vmatprep.subr.mxu0 0.0
    %312 = vmatpush1.msra.mxu0 0.0
    %313 = vmatprep.subr.mxu0 0.0
    %314 = vmatpush1.msra.mxu0 0.0
    %315 = vmatprep.subr.mxu0 0.0
    %316 = vmatpush1.msra.mxu0 0.0
    %317 = vmatprep.subr.mxu0 0.0
    %318 = vmatpush1.msra.mxu0 0.0
    %319 = vmatprep.subr.mxu0 0.0
    %320 = vmatpush1.msra.mxu0 0.0
    %321 = vmatprep.subr.mxu0 0.0
    %322 = vmatpush1.msra.mxu0 0.0
    %323 = vmatprep.subr.mxu0 0.0
    %324 = vmatpush1.msra.mxu0 0.0
    %325 = vmatprep.subr.mxu0 0.0
    %326 = vmatpush1.msra.mxu0 0.0
    %327 = vmatprep.subr.mxu0 0.0
    %328 = vmatpush1.msra.mxu0 0.0
    %329 = vmatprep.subr.mxu0 0.0
    %330 = vmatpush1.msra.mxu0 0.0
    %331 = vmatprep.subr.mxu0 0.0
    %332 = vmatpush1.msra.mxu0 0.0
    %333 = vmatprep.subr.mxu0 0.0
    %334 = vmatpush1.msra.mxu0 0.0
    %335 = vmatprep.subr.mxu0 0.0
    %336 = vmatpush1.msra.mxu0 0.0
    %337 = vmatprep.subr.mxu0 0.0
    %338 = vmatpush1.msra.mxu0 0.0
    %339 = vmatprep.mubr.f32.mxu0 0.0
    %340 = vmatmul.mubr.f32.gmra.mrb[0].mxu0 %v257
    %v341 = vpop.f32.mrb[0].mxu0
    %v342 = vadd.f32 0.0, %v341
    %v343 = vpop.f32.mrb[0].mxu0
    %344 = vmatprep.mubr.f32.mxu0 0.0
    %345 = vmatmul.mubr.f32.gmra.mrb[0].mxu0 %v262
    %v346 = vpop.f32.mrb[0].mxu0
    %v347 = vadd.f32 0.0, %v346
    %v348 = vpop.f32.mrb[0].mxu0
    %349 = vmatprep.mubr.f32.mxu0 0.0
    %350 = vmatmul.mubr.f32.gmra.mrb[0].mxu0 %v267
    %v351 = vpop.f32.mrb[0].mxu0
    %v352 = vadd.f32 0.0, %v351
    %v353 = vpop.f32.mrb[0].mxu0
    %354 = vmatprep.mubr.f32.mxu0 0.0
    %355 = vmatmul.mubr.f32.gmra.mrb[0].mxu0 %v272
    %v356 = vpop.f32.mrb[0].mxu0
    %v357 = vadd.f32 0.0, %v356
    %v358 = vpop.f32.mrb[0].mxu0
    %359 = vdwg.mxu0
    %v360 = vmul.f32 %v342, 0.0078125
    %v361 = vmul.f32 %v347, 0.0078125
    %v362 = vmul.f32 %v352, 0.0078125
    %v363 = vmul.f32 %v357, 0.0078125
    %365 = vset.pattern.permute.xlu0 0
    %366 = vperm.xlu0 %365, %v360
    %v367 = vpop.permute.xlu0 %366
    %370 = vset.pattern.permute.xlu0 0
    %371 = vperm.xlu0 %370, %v361
    %v372 = vpop.permute.xlu0 %371
    %375 = vset.pattern.permute.xlu0 0
    %376 = vperm.xlu0 %375, %v362
    %v377 = vpop.permute.xlu0 %376
    %380 = vset.pattern.permute.xlu0 0
    %381 = vperm.xlu0 %380, %v363
    %v382 = vpop.permute.xlu0 %381
    %v384 = vsub.f32 %v257, %v367
    %v385 = vsub.f32 %v262, %v372
    %v386 = vsub.f32 %v267, %v377
    %v387 = vsub.f32 %v272, %v382
    %v388 = vmul.f32 %v384, %v384
    %v389 = vmul.f32 %v385, %v385
    %v390 = vmul.f32 %v386, %v386
    %v391 = vmul.f32 %v387, %v387
    %392 = vmatprep.subr.mxu0 0.0
    %393 = vmatpush1.msra.mxu0 1.0
    %394 = vmatprep.subr.mxu0 0.0
    %395 = vmatpush1.msra.mxu0 1.0
    %396 = vmatprep.subr.mxu0 0.0
    %397 = vmatpush1.msra.mxu0 1.0
    %398 = vmatprep.subr.mxu0 0.0
    %399 = vmatpush1.msra.mxu0 1.0
    %400 = vmatprep.subr.mxu0 0.0
    %401 = vmatpush1.msra.mxu0 1.0
    %402 = vmatprep.subr.mxu0 0.0
    %403 = vmatpush1.msra.mxu0 1.0
    %404 = vmatprep.subr.mxu0 0.0
    %405 = vmatpush1.msra.mxu0 1.0
    %406 = vmatprep.subr.mxu0 0.0
    %407 = vmatpush1.msra.mxu0 1.0
    %408 = vmatprep.subr.mxu0 0.0
    %409 = vmatpush1.msra.mxu0 1.0
    %410 = vmatprep.subr.mxu0 0.0
    %411 = vmatpush1.msra.mxu0 1.0
    %412 = vmatprep.subr.mxu0 0.0
    %413 = vmatpush1.msra.mxu0 1.0
    %414 = vmatprep.subr.mxu0 0.0
    %415 = vmatpush1.msra.mxu0 1.0
    %416 = vmatprep.subr.mxu0 0.0
    %417 = vmatpush1.msra.mxu0 1.0
    %418 = vmatprep.subr.mxu0 0.0
    %419 = vmatpush1.msra.mxu0 1.0
    %420 = vmatprep.subr.mxu0 0.0
    %421 = vmatpush1.msra.mxu0 1.0
    %422 = vmatprep.subr.mxu0 0.0
    %423 = vmatpush1.msra.mxu0 1.0
    %424 = vmatprep.subr.mxu0 0.0
    %425 = vmatpush1.msra.mxu0 0.0
    %426 = vmatprep.subr.mxu0 0.0
    %427 = vmatpush1.msra.mxu0 0.0
    %428 = vmatprep.subr.mxu0 0.0
    %429 = vmatpush1.msra.mxu0 0.0
    %430 = vmatprep.subr.mxu0 0.0
    %431 = vmatpush1.msra.mxu0 0.0
    %432 = vmatprep.subr.mxu0 0.0
    %433 = vmatpush1.msra.mxu0 0.0
    %434 = vmatprep.subr.mxu0 0.0
    %435 = vmatpush1.msra.mxu0 0.0
    %436 = vmatprep.subr.mxu0 0.0
    %437 = vmatpush1.msra.mxu0 0.0
    %438 = vmatprep.subr.mxu0 0.0
    %439 = vmatpush1.msra.mxu0 0.0
    %440 = vmatprep.subr.mxu0 0.0
    %441 = vmatpush1.msra.mxu0 0.0
    %442 = vmatprep.subr.mxu0 0.0
    %443 = vmatpush1.msra.mxu0 0.0
    %444 = vmatprep.subr.mxu0 0.0
    %445 = vmatpush1.msra.mxu0 0.0
    %446 = vmatprep.subr.mxu0 0.0
    %447 = vmatpush1.msra.mxu0 0.0
    %448 = vmatprep.subr.mxu0 0.0
    %449 = vmatpush1.msra.mxu0 0.0
    %450 = vmatprep.subr.mxu0 0.0
    %451 = vmatpush1.msra.mxu0 0.0
    %452 = vmatprep.subr.mxu0 0.0
    %453 = vmatpush1.msra.mxu0 0.0
    %454 = vmatprep.subr.mxu0 0.0
    %455 = vmatpush1.msra.mxu0 0.0
    %456 = vmatprep.mubr.f32.mxu0 0.0
    %457 = vmatmul.mubr.f32.gmra.mrb[0].mxu0 %v388
    %v458 = vpop.f32.mrb[0].mxu0
    %v459 = vadd.f32 0.0, %v458
    %v460 = vpop.f32.mrb[0].mxu0
    %461 = vmatprep.mubr.f32.mxu0 0.0
    %462 = vmatmul.mubr.f32.gmra.mrb[0].mxu0 %v389
    %v463 = vpop.f32.mrb[0].mxu0
    %v464 = vadd.f32 0.0, %v463
    %v465 = vpop.f32.mrb[0].mxu0
    %466 = vmatprep.mubr.f32.mxu0 0.0
    %467 = vmatmul.mubr.f32.gmra.mrb[0].mxu0 %v390
    %v468 = vpop.f32.mrb[0].mxu0
    %v469 = vadd.f32 0.0, %v468
    %v470 = vpop.f32.mrb[0].mxu0
    %471 = vmatprep.mubr.f32.mxu0 0.0
    %472 = vmatmul.mubr.f32.gmra.mrb[0].mxu0 %v391
    %v473 = vpop.f32.mrb[0].mxu0
    %v474 = vadd.f32 0.0, %v473
    %v475 = vpop.f32.mrb[0].mxu0
    %476 = vdwg.mxu0
    %v477 = vmul.f32 %v459, 0.0078125
    %v478 = vmul.f32 %v464, 0.0078125
    %v479 = vmul.f32 %v469, 0.0078125
    %v480 = vmul.f32 %v474, 0.0078125
    %v481 = vld [vmem:[%s3] sm:$0xff]
    %v482 = vld [vmem:[%s3 + $0x8] sm:$0xff]
    %v483 = vld [vmem:[%s3 + $0x10] sm:$0xff]
    %v484 = vld [vmem:[%s3 + $0x18] sm:$0xff]
    %v485 = vadd.f32 %v477, 1e-05
    %v486 = vadd.f32 %v478, 1e-05
    %v487 = vadd.f32 %v479, 1e-05
    %v488 = vadd.f32 %v480, 1e-05
    %v489 = vrsqrt.pop %v485
    %v490 = vrsqrt.pop %v486
    %v491 = vrsqrt.pop %v487
    %v492 = vrsqrt.pop %v488
    %v493 = vmul.f32 %v481, %v489
    %v494 = vmul.f32 %v482, %v490
    %v495 = vmul.f32 %v483, %v491
    %v496 = vmul.f32 %v484, %v492
    %498 = vset.pattern.permute.xlu0 0
    %499 = vperm.xlu0 %498, %v493
    %v500 = vpop.permute.xlu0 %499
    %503 = vset.pattern.permute.xlu0 0
    %504 = vperm.xlu0 %503, %v494
    %v505 = vpop.permute.xlu0 %504
    %508 = vset.pattern.permute.xlu0 0
    %509 = vperm.xlu0 %508, %v495
    %v510 = vpop.permute.xlu0 %509
    %513 = vset.pattern.permute.xlu0 0
    %514 = vperm.xlu0 %513, %v496
    %v515 = vpop.permute.xlu0 %514
    %v517 = vmul.f32 %v384, %v500
    %v518 = vmul.f32 %v385, %v505
    %v519 = vmul.f32 %v386, %v510
    %v520 = vmul.f32 %v387, %v515
    %v521 = vld [vmem:[%s4] sm:$0xff]
    %v522 = vld [vmem:[%s4 + $0x8] sm:$0xff]
    %v523 = vld [vmem:[%s4 + $0x10] sm:$0xff]
    %v524 = vld [vmem:[%s4 + $0x18] sm:$0xff]
    %526 = vset.pattern.permute.xlu0 0
    %527 = vperm.xlu0 %526, %v521
    %v528 = vpop.permute.xlu0 %527
    %531 = vset.pattern.permute.xlu0 0
    %532 = vperm.xlu0 %531, %v522
    %v533 = vpop.permute.xlu0 %532
    %536 = vset.pattern.permute.xlu0 0
    %537 = vperm.xlu0 %536, %v523
    %v538 = vpop.permute.xlu0 %537
    %541 = vset.pattern.permute.xlu0 0
    %542 = vperm.xlu0 %541, %v524
    %v543 = vpop.permute.xlu0 %542
    %v545 = vadd.f32 %v517, %v528
    %v546 = vadd.f32 %v518, %v533
    %v547 = vadd.f32 %v519, %v538
    %v548 = vadd.f32 %v520, %v543
    %v549 = vmax.f32 %v545, 0.0
    %v550 = vmax.f32 %v546, 0.0
    %v551 = vmax.f32 %v547, 0.0
    %v552 = vmax.f32 %v548, 0.0
    %v553 = vadd.f32 %v549, %v68
    %v554 = vadd.f32 %v550, %v69
    %v555 = vadd.f32 %v551, %v70
    %v556 = vadd.f32 %v552, %v71
    %s557 = scalar_lea.vmem %s2, 32
    %v558 = vld [vmem:[%s557] sm:$0xff]
    %v559 = vld [vmem:[%s557 + $0x8] sm:$0xff]
    %v560 = vld [vmem:[%s557 + $0x10] sm:$0xff]
    %v561 = vld [vmem:[%s557 + $0x18] sm:$0xff]
    %v563 = vsel %vm76, %v558, 0
    %v566 = vsel %vm76, %v559, 0
    %v569 = vsel %vm76, %v560, 0
    %v572 = vsel %vm76, %v561, 0
    %574 = vmatprep.subr.mxu0 0.0
    %575 = vmatpush1.msra.mxu0 %v553
    %576 = vmatprep.subr.mxu0 0.0
    %577 = vmatpush1.msra.mxu0 %v554
    %578 = vmatprep.subr.mxu0 0.0
    %579 = vmatpush1.msra.mxu0 %v555
    %580 = vmatprep.subr.mxu0 0.0
    %581 = vmatpush1.msra.mxu0 %v556
    %582 = vmatprep.subr.mxu0 0.0
    %583 = vmatpush1.msra.mxu0 0.0
    %584 = vmatprep.subr.mxu0 0.0
    %585 = vmatpush1.msra.mxu0 0.0
    %586 = vmatprep.subr.mxu0 0.0
    %587 = vmatpush1.msra.mxu0 0.0
    %588 = vmatprep.subr.mxu0 0.0
    %589 = vmatpush1.msra.mxu0 0.0
    %590 = vmatprep.subr.mxu0 0.0
    %591 = vmatpush1.msra.mxu0 0.0
    %592 = vmatprep.subr.mxu0 0.0
    %593 = vmatpush1.msra.mxu0 0.0
    %594 = vmatprep.subr.mxu0 0.0
    %595 = vmatpush1.msra.mxu0 0.0
    %596 = vmatprep.subr.mxu0 0.0
    %597 = vmatpush1.msra.mxu0 0.0
    %598 = vmatprep.subr.mxu0 0.0
    %599 = vmatpush1.msra.mxu0 0.0
    %600 = vmatprep.subr.mxu0 0.0
    %601 = vmatpush1.msra.mxu0 0.0
    %602 = vmatprep.subr.mxu0 0.0
    %603 = vmatpush1.msra.mxu0 0.0
    %604 = vmatprep.subr.mxu0 0.0
    %605 = vmatpush1.msra.mxu0 0.0
    %606 = vmatprep.subr.mxu0 0.0
    %607 = vmatpush1.msra.mxu0 0.0
    %608 = vmatprep.subr.mxu0 0.0
    %609 = vmatpush1.msra.mxu0 0.0
    %610 = vmatprep.subr.mxu0 0.0
    %611 = vmatpush1.msra.mxu0 0.0
    %612 = vmatprep.subr.mxu0 0.0
    %613 = vmatpush1.msra.mxu0 0.0
    %614 = vmatprep.subr.mxu0 0.0
    %615 = vmatpush1.msra.mxu0 0.0
    %616 = vmatprep.subr.mxu0 0.0
    %617 = vmatpush1.msra.mxu0 0.0
    %618 = vmatprep.subr.mxu0 0.0
    %619 = vmatpush1.msra.mxu0 0.0
    %620 = vmatprep.subr.mxu0 0.0
    %621 = vmatpush1.msra.mxu0 0.0
    %622 = vmatprep.subr.mxu0 0.0
    %623 = vmatpush1.msra.mxu0 0.0
    %624 = vmatprep.subr.mxu0 0.0
    %625 = vmatpush1.msra.mxu0 0.0
    %626 = vmatprep.subr.mxu0 0.0
    %627 = vmatpush1.msra.mxu0 0.0
    %628 = vmatprep.subr.mxu0 0.0
    %629 = vmatpush1.msra.mxu0 0.0
    %630 = vmatprep.subr.mxu0 0.0
    %631 = vmatpush1.msra.mxu0 0.0
    %632 = vmatprep.subr.mxu0 0.0
    %633 = vmatpush1.msra.mxu0 0.0
    %634 = vmatprep.subr.mxu0 0.0
    %635 = vmatpush1.msra.mxu0 0.0
    %636 = vmatprep.subr.mxu0 0.0
    %637 = vmatpush1.msra.mxu0 0.0
    %638 = vmatprep.mubr.f32.mxu0 0.0
    %639 = vmatmul.mubr.f32.gmra.mrb[0].mxu0 %v563
    %v640 = vpop.f32.mrb[0].mxu0
    %v641 = vadd.f32 0.0, %v640
    %v642 = vpop.f32.mrb[0].mxu0
    %643 = vmatprep.mubr.f32.mxu0 0.0
    %644 = vmatmul.mubr.f32.gmra.mrb[0].mxu0 %v566
    %v645 = vpop.f32.mrb[0].mxu0
    %v646 = vadd.f32 0.0, %v645
    %v647 = vpop.f32.mrb[0].mxu0
    %648 = vmatprep.mubr.f32.mxu0 0.0
    %649 = vmatmul.mubr.f32.gmra.mrb[0].mxu0 %v569
    %v650 = vpop.f32.mrb[0].mxu0
    %v651 = vadd.f32 0.0, %v650
    %v652 = vpop.f32.mrb[0].mxu0
    %653 = vmatprep.mubr.f32.mxu0 0.0
    %654 = vmatmul.mubr.f32.gmra.mrb[0].mxu0 %v572
    %v655 = vpop.f32.mrb[0].mxu0
    %v656 = vadd.f32 0.0, %v655
    %v657 = vpop.f32.mrb[0].mxu0
    %658 = vdwg.mxu0
    %659 = vmatprep.subr.mxu0 0.0
    %660 = vmatpush1.msra.mxu0 %v174
    %661 = vmatprep.subr.mxu0 0.0
    %662 = vmatpush1.msra.mxu0 %v175
    %663 = vmatprep.subr.mxu0 0.0
    %664 = vmatpush1.msra.mxu0 %v176
    %665 = vmatprep.subr.mxu0 0.0
    %666 = vmatpush1.msra.mxu0 %v177
    %667 = vmatprep.subr.mxu0 0.0
    %668 = vmatpush1.msra.mxu0 %v178
    %669 = vmatprep.subr.mxu0 0.0
    %670 = vmatpush1.msra.mxu0 %v179
    %671 = vmatprep.subr.mxu0 0.0
    %672 = vmatpush1.msra.mxu0 %v180
    %673 = vmatprep.subr.mxu0 0.0
    %674 = vmatpush1.msra.mxu0 %v181
    %675 = vmatprep.subr.mxu0 0.0
    %676 = vmatpush1.msra.mxu0 %v182
    %677 = vmatprep.subr.mxu0 0.0
    %678 = vmatpush1.msra.mxu0 %v183
    %679 = vmatprep.subr.mxu0 0.0
    %680 = vmatpush1.msra.mxu0 %v184
    %681 = vmatprep.subr.mxu0 0.0
    %682 = vmatpush1.msra.mxu0 %v185
    %683 = vmatprep.subr.mxu0 0.0
    %684 = vmatpush1.msra.mxu0 %v186
    %685 = vmatprep.subr.mxu0 0.0
    %686 = vmatpush1.msra.mxu0 %v187
    %687 = vmatprep.subr.mxu0 0.0
    %688 = vmatpush1.msra.mxu0 %v188
    %689 = vmatprep.subr.mxu0 0.0
    %690 = vmatpush1.msra.mxu0 %v189
    %691 = vmatprep.subr.mxu0 0.0
    %692 = vmatpush1.msra.mxu0 0.0
    %693 = vmatprep.subr.mxu0 0.0
    %694 = vmatpush1.msra.mxu0 0.0
    %695 = vmatprep.subr.mxu0 0.0
    %696 = vmatpush1.msra.mxu0 0.0
    %697 = vmatprep.subr.mxu0 0.0
    %698 = vmatpush1.msra.mxu0 0.0
    %699 = vmatprep.subr.mxu0 0.0
    %700 = vmatpush1.msra.mxu0 0.0
    %701 = vmatprep.subr.mxu0 0.0
    %702 = vmatpush1.msra.mxu0 0.0
    %703 = vmatprep.subr.mxu0 0.0
    %704 = vmatpush1.msra.mxu0 0.0
    %705 = vmatprep.subr.mxu0 0.0
    %706 = vmatpush1.msra.mxu0 0.0
    %707 = vmatprep.subr.mxu0 0.0
    %708 = vmatpush1.msra.mxu0 0.0
    %709 = vmatprep.subr.mxu0 0.0
    %710 = vmatpush1.msra.mxu0 0.0
    %711 = vmatprep.subr.mxu0 0.0
    %712 = vmatpush1.msra.mxu0 0.0
    %713 = vmatprep.subr.mxu0 0.0
    %714 = vmatpush1.msra.mxu0 0.0
    %715 = vmatprep.subr.mxu0 0.0
    %716 = vmatpush1.msra.mxu0 0.0
    %717 = vmatprep.subr.mxu0 0.0
    %718 = vmatpush1.msra.mxu0 0.0
    %719 = vmatprep.subr.mxu0 0.0
    %720 = vmatpush1.msra.mxu0 0.0
    %721 = vmatprep.subr.mxu0 0.0
    %722 = vmatpush1.msra.mxu0 0.0
    %723 = vmatprep.mubr.f32.mxu0 0.0
    %724 = vmatmul.mubr.f32.gmra.mrb[0].mxu0 %v641
    %v725 = vpop.f32.mrb[0].mxu0
    %v726 = vadd.f32 0.0, %v725
    %v727 = vpop.f32.mrb[0].mxu0
    %728 = vmatprep.mubr.f32.mxu0 0.0
    %729 = vmatmul.mubr.f32.gmra.mrb[0].mxu0 %v646
    %v730 = vpop.f32.mrb[0].mxu0
    %v731 = vadd.f32 0.0, %v730
    %v732 = vpop.f32.mrb[0].mxu0
    %733 = vmatprep.mubr.f32.mxu0 0.0
    %734 = vmatmul.mubr.f32.gmra.mrb[0].mxu0 %v651
    %v735 = vpop.f32.mrb[0].mxu0
    %v736 = vadd.f32 0.0, %v735
    %v737 = vpop.f32.mrb[0].mxu0
    %738 = vmatprep.mubr.f32.mxu0 0.0
    %739 = vmatmul.mubr.f32.gmra.mrb[0].mxu0 %v656
    %v740 = vpop.f32.mrb[0].mxu0
    %v741 = vadd.f32 0.0, %v740
    %v742 = vpop.f32.mrb[0].mxu0
    %743 = vdwg.mxu0
    %744 = vmatprep.subr.mxu0 0.0
    %745 = vmatpush1.msra.mxu0 1.0
    %746 = vmatprep.subr.mxu0 0.0
    %747 = vmatpush1.msra.mxu0 1.0
    %748 = vmatprep.subr.mxu0 0.0
    %749 = vmatpush1.msra.mxu0 1.0
    %750 = vmatprep.subr.mxu0 0.0
    %751 = vmatpush1.msra.mxu0 1.0
    %752 = vmatprep.subr.mxu0 0.0
    %753 = vmatpush1.msra.mxu0 1.0
    %754 = vmatprep.subr.mxu0 0.0
    %755 = vmatpush1.msra.mxu0 1.0
    %756 = vmatprep.subr.mxu0 0.0
    %757 = vmatpush1.msra.mxu0 1.0
    %758 = vmatprep.subr.mxu0 0.0
    %759 = vmatpush1.msra.mxu0 1.0
    %760 = vmatprep.subr.mxu0 0.0
    %761 = vmatpush1.msra.mxu0 1.0
    %762 = vmatprep.subr.mxu0 0.0
    %763 = vmatpush1.msra.mxu0 1.0
    %764 = vmatprep.subr.mxu0 0.0
    %765 = vmatpush1.msra.mxu0 1.0
    %766 = vmatprep.subr.mxu0 0.0
    %767 = vmatpush1.msra.mxu0 1.0
    %768 = vmatprep.subr.mxu0 0.0
    %769 = vmatpush1.msra.mxu0 1.0
    %770 = vmatprep.subr.mxu0 0.0
    %771 = vmatpush1.msra.mxu0 1.0
    %772 = vmatprep.subr.mxu0 0.0
    %773 = vmatpush1.msra.mxu0 1.0
    %774 = vmatprep.subr.mxu0 0.0
    %775 = vmatpush1.msra.mxu0 1.0
    %776 = vmatprep.subr.mxu0 0.0
    %777 = vmatpush1.msra.mxu0 0.0
    %778 = vmatprep.subr.mxu0 0.0
    %779 = vmatpush1.msra.mxu0 0.0
    %780 = vmatprep.subr.mxu0 0.0
    %781 = vmatpush1.msra.mxu0 0.0
    %782 = vmatprep.subr.mxu0 0.0
    %783 = vmatpush1.msra.mxu0 0.0
    %784 = vmatprep.subr.mxu0 0.0
    %785 = vmatpush1.msra.mxu0 0.0
    %786 = vmatprep.subr.mxu0 0.0
    %787 = vmatpush1.msra.mxu0 0.0
    %788 = vmatprep.subr.mxu0 0.0
    %789 = vmatpush1.msra.mxu0 0.0
    %790 = vmatprep.subr.mxu0 0.0
    %791 = vmatpush1.msra.mxu0 0.0
    %792 = vmatprep.subr.mxu0 0.0
    %793 = vmatpush1.msra.mxu0 0.0
    %794 = vmatprep.subr.mxu0 0.0
    %795 = vmatpush1.msra.mxu0 0.0
    %796 = vmatprep.subr.mxu0 0.0
    %797 = vmatpush1.msra.mxu0 0.0
    %798 = vmatprep.subr.mxu0 0.0
    %799 = vmatpush1.msra.mxu0 0.0
    %800 = vmatprep.subr.mxu0 0.0
    %801 = vmatpush1.msra.mxu0 0.0
    %802 = vmatprep.subr.mxu0 0.0
    %803 = vmatpush1.msra.mxu0 0.0
    %804 = vmatprep.subr.mxu0 0.0
    %805 = vmatpush1.msra.mxu0 0.0
    %806 = vmatprep.subr.mxu0 0.0
    %807 = vmatpush1.msra.mxu0 0.0
    %808 = vmatprep.mubr.f32.mxu0 0.0
    %809 = vmatmul.mubr.f32.gmra.mrb[0].mxu0 %v726
    %v810 = vpop.f32.mrb[0].mxu0
    %v811 = vadd.f32 0.0, %v810
    %v812 = vpop.f32.mrb[0].mxu0
    %813 = vmatprep.mubr.f32.mxu0 0.0
    %814 = vmatmul.mubr.f32.gmra.mrb[0].mxu0 %v731
    %v815 = vpop.f32.mrb[0].mxu0
    %v816 = vadd.f32 0.0, %v815
    %v817 = vpop.f32.mrb[0].mxu0
    %818 = vmatprep.mubr.f32.mxu0 0.0
    %819 = vmatmul.mubr.f32.gmra.mrb[0].mxu0 %v736
    %v820 = vpop.f32.mrb[0].mxu0
    %v821 = vadd.f32 0.0, %v820
    %v822 = vpop.f32.mrb[0].mxu0
    %823 = vmatprep.mubr.f32.mxu0 0.0
    %824 = vmatmul.mubr.f32.gmra.mrb[0].mxu0 %v741
    %v825 = vpop.f32.mrb[0].mxu0
    %v826 = vadd.f32 0.0, %v825
    %v827 = vpop.f32.mrb[0].mxu0
    %828 = vdwg.mxu0
    %v829 = vmul.f32 %v811, 0.0078125
    %v830 = vmul.f32 %v816, 0.0078125
    %v831 = vmul.f32 %v821, 0.0078125
    %v832 = vmul.f32 %v826, 0.0078125
    %834 = vset.pattern.permute.xlu0 0
    %835 = vperm.xlu0 %834, %v829
    %v836 = vpop.permute.xlu0 %835
    %839 = vset.pattern.permute.xlu0 0
    %840 = vperm.xlu0 %839, %v830
    %v841 = vpop.permute.xlu0 %840
    %844 = vset.pattern.permute.xlu0 0
    %845 = vperm.xlu0 %844, %v831
    %v846 = vpop.permute.xlu0 %845
    %849 = vset.pattern.permute.xlu0 0
    %850 = vperm.xlu0 %849, %v832
    %v851 = vpop.permute.xlu0 %850
    %v853 = vsub.f32 %v726, %v836
    %v854 = vsub.f32 %v731, %v841
    %v855 = vsub.f32 %v736, %v846
    %v856 = vsub.f32 %v741, %v851
    %v857 = vmul.f32 %v853, %v853
    %v858 = vmul.f32 %v854, %v854
    %v859 = vmul.f32 %v855, %v855
    %v860 = vmul.f32 %v856, %v856
    %861 = vmatprep.subr.mxu0 0.0
    %862 = vmatpush1.msra.mxu0 1.0
    %863 = vmatprep.subr.mxu0 0.0
    %864 = vmatpush1.msra.mxu0 1.0
    %865 = vmatprep.subr.mxu0 0.0
    %866 = vmatpush1.msra.mxu0 1.0
    %867 = vmatprep.subr.mxu0 0.0
    %868 = vmatpush1.msra.mxu0 1.0
    %869 = vmatprep.subr.mxu0 0.0
    %870 = vmatpush1.msra.mxu0 1.0
    %871 = vmatprep.subr.mxu0 0.0
    %872 = vmatpush1.msra.mxu0 1.0
    %873 = vmatprep.subr.mxu0 0.0
    %874 = vmatpush1.msra.mxu0 1.0
    %875 = vmatprep.subr.mxu0 0.0
    %876 = vmatpush1.msra.mxu0 1.0
    %877 = vmatprep.subr.mxu0 0.0
    %878 = vmatpush1.msra.mxu0 1.0
    %879 = vmatprep.subr.mxu0 0.0
    %880 = vmatpush1.msra.mxu0 1.0
    %881 = vmatprep.subr.mxu0 0.0
    %882 = vmatpush1.msra.mxu0 1.0
    %883 = vmatprep.subr.mxu0 0.0
    %884 = vmatpush1.msra.mxu0 1.0
    %885 = vmatprep.subr.mxu0 0.0
    %886 = vmatpush1.msra.mxu0 1.0
    %887 = vmatprep.subr.mxu0 0.0
    %888 = vmatpush1.msra.mxu0 1.0
    %889 = vmatprep.subr.mxu0 0.0
    %890 = vmatpush1.msra.mxu0 1.0
    %891 = vmatprep.subr.mxu0 0.0
    %892 = vmatpush1.msra.mxu0 1.0
    %893 = vmatprep.subr.mxu0 0.0
    %894 = vmatpush1.msra.mxu0 0.0
    %895 = vmatprep.subr.mxu0 0.0
    %896 = vmatpush1.msra.mxu0 0.0
    %897 = vmatprep.subr.mxu0 0.0
    %898 = vmatpush1.msra.mxu0 0.0
    %899 = vmatprep.subr.mxu0 0.0
    %900 = vmatpush1.msra.mxu0 0.0
    %901 = vmatprep.subr.mxu0 0.0
    %902 = vmatpush1.msra.mxu0 0.0
    %903 = vmatprep.subr.mxu0 0.0
    %904 = vmatpush1.msra.mxu0 0.0
    %905 = vmatprep.subr.mxu0 0.0
    %906 = vmatpush1.msra.mxu0 0.0
    %907 = vmatprep.subr.mxu0 0.0
    %908 = vmatpush1.msra.mxu0 0.0
    %909 = vmatprep.subr.mxu0 0.0
    %910 = vmatpush1.msra.mxu0 0.0
    %911 = vmatprep.subr.mxu0 0.0
    %912 = vmatpush1.msra.mxu0 0.0
    %913 = vmatprep.subr.mxu0 0.0
    %914 = vmatpush1.msra.mxu0 0.0
    %915 = vmatprep.subr.mxu0 0.0
    %916 = vmatpush1.msra.mxu0 0.0
    %917 = vmatprep.subr.mxu0 0.0
    %918 = vmatpush1.msra.mxu0 0.0
    %919 = vmatprep.subr.mxu0 0.0
    %920 = vmatpush1.msra.mxu0 0.0
    %921 = vmatprep.subr.mxu0 0.0
    %922 = vmatpush1.msra.mxu0 0.0
    %923 = vmatprep.subr.mxu0 0.0
    %924 = vmatpush1.msra.mxu0 0.0
    %925 = vmatprep.mubr.f32.mxu0 0.0
    %926 = vmatmul.mubr.f32.gmra.mrb[0].mxu0 %v857
    %v927 = vpop.f32.mrb[0].mxu0
    %v928 = vadd.f32 0.0, %v927
    %v929 = vpop.f32.mrb[0].mxu0
    %930 = vmatprep.mubr.f32.mxu0 0.0
    %931 = vmatmul.mubr.f32.gmra.mrb[0].mxu0 %v858
    %v932 = vpop.f32.mrb[0].mxu0
    %v933 = vadd.f32 0.0, %v932
    %v934 = vpop.f32.mrb[0].mxu0
    %935 = vmatprep.mubr.f32.mxu0 0.0
    %936 = vmatmul.mubr.f32.gmra.mrb[0].mxu0 %v859
    %v937 = vpop.f32.mrb[0].mxu0
    %v938 = vadd.f32 0.0, %v937
    %v939 = vpop.f32.mrb[0].mxu0
    %940 = vmatprep.mubr.f32.mxu0 0.0
    %941 = vmatmul.mubr.f32.gmra.mrb[0].mxu0 %v860
    %v942 = vpop.f32.mrb[0].mxu0
    %v943 = vadd.f32 0.0, %v942
    %v944 = vpop.f32.mrb[0].mxu0
    %945 = vdwg.mxu0
    %v946 = vmul.f32 %v928, 0.0078125
    %v947 = vmul.f32 %v933, 0.0078125
    %v948 = vmul.f32 %v938, 0.0078125
    %v949 = vmul.f32 %v943, 0.0078125
    %v950 = vadd.f32 %v946, 1e-05
    %v951 = vadd.f32 %v947, 1e-05
    %v952 = vadd.f32 %v948, 1e-05
    %v953 = vadd.f32 %v949, 1e-05
    %v954 = vrsqrt.pop %v950
    %v955 = vrsqrt.pop %v951
    %v956 = vrsqrt.pop %v952
    %v957 = vrsqrt.pop %v953
    %962 = vrot.lane.b32.xlu0 %v954, 1
    %v963 = vpop.permute.xlu0 %962
    %964 = vrot.lane.b32.xlu0 %v955, 1
    %v965 = vpop.permute.xlu0 %964
    %966 = vrot.lane.b32.xlu0 %v956, 1
    %v967 = vpop.permute.xlu0 %966
    %968 = vrot.lane.b32.xlu0 %v957, 1
    %v969 = vpop.permute.xlu0 %968
    %v974 = vmul.f32 %v481, %v963
    %v975 = vmul.f32 %v482, %v965
    %v976 = vmul.f32 %v483, %v967
    %v977 = vmul.f32 %v484, %v969
    %979 = vset.pattern.permute.xlu0 1
    %980 = vperm.xlu0 %979, %v974
    %v981 = vpop.permute.xlu0 %980
    %984 = vset.pattern.permute.xlu0 1
    %985 = vperm.xlu0 %984, %v975
    %v986 = vpop.permute.xlu0 %985
    %989 = vset.pattern.permute.xlu0 1
    %990 = vperm.xlu0 %989, %v976
    %v991 = vpop.permute.xlu0 %990
    %994 = vset.pattern.permute.xlu0 1
    %995 = vperm.xlu0 %994, %v977
    %v996 = vpop.permute.xlu0 %995
    %v998 = vmul.f32 %v853, %v981
    %v999 = vmul.f32 %v854, %v986
    %v1000 = vmul.f32 %v855, %v991
    %v1001 = vmul.f32 %v856, %v996
    %1002 = vset.pattern.permute.xlu0 1
    %1003 = vperm.xlu0 %1002, %v521
    %v1004 = vpop.permute.xlu0 %1003
    %1006 = vset.pattern.permute.xlu0 1
    %1007 = vperm.xlu0 %1006, %v522
    %v1008 = vpop.permute.xlu0 %1007
    %1010 = vset.pattern.permute.xlu0 1
    %1011 = vperm.xlu0 %1010, %v523
    %v1012 = vpop.permute.xlu0 %1011
    %1014 = vset.pattern.permute.xlu0 1
    %1015 = vperm.xlu0 %1014, %v524
    %v1016 = vpop.permute.xlu0 %1015
    %v1018 = vadd.f32 %v998, %v1004
    %v1019 = vadd.f32 %v999, %v1008
    %v1020 = vadd.f32 %v1000, %v1012
    %v1021 = vadd.f32 %v1001, %v1016
    %v1022 = vmax.f32 %v1018, 0.0
    %v1023 = vmax.f32 %v1019, 0.0
    %v1024 = vmax.f32 %v1020, 0.0
    %v1025 = vmax.f32 %v1021, 0.0
    %v1026 = vadd.f32 %v1022, %v553
    %v1027 = vadd.f32 %v1023, %v554
    %v1028 = vadd.f32 %v1024, %v555
    %v1029 = vadd.f32 %v1025, %v556
    %s1030 = scalar_lea.vmem %s2, 64
    %v1031 = vld [vmem:[%s1030] sm:$0xff]
    %v1032 = vld [vmem:[%s1030 + $0x8] sm:$0xff]
    %v1033 = vld [vmem:[%s1030 + $0x10] sm:$0xff]
    %v1034 = vld [vmem:[%s1030 + $0x18] sm:$0xff]
    %v1036 = vsel %vm76, %v1031, 0
    %v1039 = vsel %vm76, %v1032, 0
    %v1042 = vsel %vm76, %v1033, 0
    %v1045 = vsel %vm76, %v1034, 0
    %1047 = vmatprep.subr.mxu0 0.0
    %1048 = vmatpush1.msra.mxu0 %v1026
    %1049 = vmatprep.subr.mxu0 0.0
    %1050 = vmatpush1.msra.mxu0 %v1027
    %1051 = vmatprep.subr.mxu0 0.0
    %1052 = vmatpush1.msra.mxu0 %v1028
    %1053 = vmatprep.subr.mxu0 0.0
    %1054 = vmatpush1.msra.mxu0 %v1029
    %1055 = vmatprep.subr.mxu0 0.0
    %1056 = vmatpush1.msra.mxu0 0.0
    %1057 = vmatprep.subr.mxu0 0.0
    %1058 = vmatpush1.msra.mxu0 0.0
    %1059 = vmatprep.subr.mxu0 0.0
    %1060 = vmatpush1.msra.mxu0 0.0
    %1061 = vmatprep.subr.mxu0 0.0
    %1062 = vmatpush1.msra.mxu0 0.0
    %1063 = vmatprep.subr.mxu0 0.0
    %1064 = vmatpush1.msra.mxu0 0.0
    %1065 = vmatprep.subr.mxu0 0.0
    %1066 = vmatpush1.msra.mxu0 0.0
    %1067 = vmatprep.subr.mxu0 0.0
    %1068 = vmatpush1.msra.mxu0 0.0
    %1069 = vmatprep.subr.mxu0 0.0
    %1070 = vmatpush1.msra.mxu0 0.0
    %1071 = vmatprep.subr.mxu0 0.0
    %1072 = vmatpush1.msra.mxu0 0.0
    %1073 = vmatprep.subr.mxu0 0.0
    %1074 = vmatpush1.msra.mxu0 0.0
    %1075 = vmatprep.subr.mxu0 0.0
    %1076 = vmatpush1.msra.mxu0 0.0
    %1077 = vmatprep.subr.mxu0 0.0
    %1078 = vmatpush1.msra.mxu0 0.0
    %1079 = vmatprep.subr.mxu0 0.0
    %1080 = vmatpush1.msra.mxu0 0.0
    %1081 = vmatprep.subr.mxu0 0.0
    %1082 = vmatpush1.msra.mxu0 0.0
    %1083 = vmatprep.subr.mxu0 0.0
    %1084 = vmatpush1.msra.mxu0 0.0
    %1085 = vmatprep.subr.mxu0 0.0
    %1086 = vmatpush1.msra.mxu0 0.0
    %1087 = vmatprep.subr.mxu0 0.0
    %1088 = vmatpush1.msra.mxu0 0.0
    %1089 = vmatprep.subr.mxu0 0.0
    %1090 = vmatpush1.msra.mxu0 0.0
    %1091 = vmatprep.subr.mxu0 0.0
    %1092 = vmatpush1.msra.mxu0 0.0
    %1093 = vmatprep.subr.mxu0 0.0
    %1094 = vmatpush1.msra.mxu0 0.0
    %1095 = vmatprep.subr.mxu0 0.0
    %1096 = vmatpush1.msra.mxu0 0.0
    %1097 = vmatprep.subr.mxu0 0.0
    %1098 = vmatpush1.msra.mxu0 0.0
    %1099 = vmatprep.subr.mxu0 0.0
    %1100 = vmatpush1.msra.mxu0 0.0
    %1101 = vmatprep.subr.mxu0 0.0
    %1102 = vmatpush1.msra.mxu0 0.0
    %1103 = vmatprep.subr.mxu0 0.0
    %1104 = vmatpush1.msra.mxu0 0.0
    %1105 = vmatprep.subr.mxu0 0.0
    %1106 = vmatpush1.msra.mxu0 0.0
    %1107 = vmatprep.subr.mxu0 0.0
    %1108 = vmatpush1.msra.mxu0 0.0
    %1109 = vmatprep.subr.mxu0 0.0
    %1110 = vmatpush1.msra.mxu0 0.0
    %1111 = vmatprep.mubr.f32.mxu0 0.0
    %1112 = vmatmul.mubr.f32.gmra.mrb[0].mxu0 %v1036
    %v1113 = vpop.f32.mrb[0].mxu0
    %v1114 = vadd.f32 0.0, %v1113
    %v1115 = vpop.f32.mrb[0].mxu0
    %1116 = vmatprep.mubr.f32.mxu0 0.0
    %1117 = vmatmul.mubr.f32.gmra.mrb[0].mxu0 %v1039
    %v1118 = vpop.f32.mrb[0].mxu0
    %v1119 = vadd.f32 0.0, %v1118
    %v1120 = vpop.f32.mrb[0].mxu0
    %1121 = vmatprep.mubr.f32.mxu0 0.0
    %1122 = vmatmul.mubr.f32.gmra.mrb[0].mxu0 %v1042
    %v1123 = vpop.f32.mrb[0].mxu0
    %v1124 = vadd.f32 0.0, %v1123
    %v1125 = vpop.f32.mrb[0].mxu0
    %1126 = vmatprep.mubr.f32.mxu0 0.0
    %1127 = vmatmul.mubr.f32.gmra.mrb[0].mxu0 %v1045
    %v1128 = vpop.f32.mrb[0].mxu0
    %v1129 = vadd.f32 0.0, %v1128
    %v1130 = vpop.f32.mrb[0].mxu0
    %1131 = vdwg.mxu0
    %1132 = vmatprep.subr.mxu0 0.0
    %1133 = vmatpush1.msra.mxu0 %v174
    %1134 = vmatprep.subr.mxu0 0.0
    %1135 = vmatpush1.msra.mxu0 %v175
    %1136 = vmatprep.subr.mxu0 0.0
    %1137 = vmatpush1.msra.mxu0 %v176
    %1138 = vmatprep.subr.mxu0 0.0
    %1139 = vmatpush1.msra.mxu0 %v177
    %1140 = vmatprep.subr.mxu0 0.0
    %1141 = vmatpush1.msra.mxu0 %v178
    %1142 = vmatprep.subr.mxu0 0.0
    %1143 = vmatpush1.msra.mxu0 %v179
    %1144 = vmatprep.subr.mxu0 0.0
    %1145 = vmatpush1.msra.mxu0 %v180
    %1146 = vmatprep.subr.mxu0 0.0
    %1147 = vmatpush1.msra.mxu0 %v181
    %1148 = vmatprep.subr.mxu0 0.0
    %1149 = vmatpush1.msra.mxu0 %v182
    %1150 = vmatprep.subr.mxu0 0.0
    %1151 = vmatpush1.msra.mxu0 %v183
    %1152 = vmatprep.subr.mxu0 0.0
    %1153 = vmatpush1.msra.mxu0 %v184
    %1154 = vmatprep.subr.mxu0 0.0
    %1155 = vmatpush1.msra.mxu0 %v185
    %1156 = vmatprep.subr.mxu0 0.0
    %1157 = vmatpush1.msra.mxu0 %v186
    %1158 = vmatprep.subr.mxu0 0.0
    %1159 = vmatpush1.msra.mxu0 %v187
    %1160 = vmatprep.subr.mxu0 0.0
    %1161 = vmatpush1.msra.mxu0 %v188
    %1162 = vmatprep.subr.mxu0 0.0
    %1163 = vmatpush1.msra.mxu0 %v189
    %1164 = vmatprep.subr.mxu0 0.0
    %1165 = vmatpush1.msra.mxu0 0.0
    %1166 = vmatprep.subr.mxu0 0.0
    %1167 = vmatpush1.msra.mxu0 0.0
    %1168 = vmatprep.subr.mxu0 0.0
    %1169 = vmatpush1.msra.mxu0 0.0
    %1170 = vmatprep.subr.mxu0 0.0
    %1171 = vmatpush1.msra.mxu0 0.0
    %1172 = vmatprep.subr.mxu0 0.0
    %1173 = vmatpush1.msra.mxu0 0.0
    %1174 = vmatprep.subr.mxu0 0.0
    %1175 = vmatpush1.msra.mxu0 0.0
    %1176 = vmatprep.subr.mxu0 0.0
    %1177 = vmatpush1.msra.mxu0 0.0
    %1178 = vmatprep.subr.mxu0 0.0
    %1179 = vmatpush1.msra.mxu0 0.0
    %1180 = vmatprep.subr.mxu0 0.0
    %1181 = vmatpush1.msra.mxu0 0.0
    %1182 = vmatprep.subr.mxu0 0.0
    %1183 = vmatpush1.msra.mxu0 0.0
    %1184 = vmatprep.subr.mxu0 0.0
    %1185 = vmatpush1.msra.mxu0 0.0
    %1186 = vmatprep.subr.mxu0 0.0
    %1187 = vmatpush1.msra.mxu0 0.0
    %1188 = vmatprep.subr.mxu0 0.0
    %1189 = vmatpush1.msra.mxu0 0.0
    %1190 = vmatprep.subr.mxu0 0.0
    %1191 = vmatpush1.msra.mxu0 0.0
    %1192 = vmatprep.subr.mxu0 0.0
    %1193 = vmatpush1.msra.mxu0 0.0
    %1194 = vmatprep.subr.mxu0 0.0
    %1195 = vmatpush1.msra.mxu0 0.0
    %1196 = vmatprep.mubr.f32.mxu0 0.0
    %1197 = vmatmul.mubr.f32.gmra.mrb[0].mxu0 %v1114
    %v1198 = vpop.f32.mrb[0].mxu0
    %v1199 = vadd.f32 0.0, %v1198
    %v1200 = vpop.f32.mrb[0].mxu0
    %1201 = vmatprep.mubr.f32.mxu0 0.0
    %1202 = vmatmul.mubr.f32.gmra.mrb[0].mxu0 %v1119
    %v1203 = vpop.f32.mrb[0].mxu0
    %v1204 = vadd.f32 0.0, %v1203
    %v1205 = vpop.f32.mrb[0].mxu0
    %1206 = vmatprep.mubr.f32.mxu0 0.0
    %1207 = vmatmul.mubr.f32.gmra.mrb[0].mxu0 %v1124
    %v1208 = vpop.f32.mrb[0].mxu0
    %v1209 = vadd.f32 0.0, %v1208
    %v1210 = vpop.f32.mrb[0].mxu0
    %1211 = vmatprep.mubr.f32.mxu0 0.0
    %1212 = vmatmul.mubr.f32.gmra.mrb[0].mxu0 %v1129
    %v1213 = vpop.f32.mrb[0].mxu0
    %v1214 = vadd.f32 0.0, %v1213
    %v1215 = vpop.f32.mrb[0].mxu0
    %1216 = vdwg.mxu0
    %1217 = vmatprep.subr.mxu0 0.0
    %1218 = vmatpush1.msra.mxu0 1.0
    %1219 = vmatprep.subr.mxu0 0.0
    %1220 = vmatpush1.msra.mxu0 1.0
    %1221 = vmatprep.subr.mxu0 0.0
    %1222 = vmatpush1.msra.mxu0 1.0
    %1223 = vmatprep.subr.mxu0 0.0
    %1224 = vmatpush1.msra.mxu0 1.0
    %1225 = vmatprep.subr.mxu0 0.0
    %1226 = vmatpush1.msra.mxu0 1.0
    %1227 = vmatprep.subr.mxu0 0.0
    %1228 = vmatpush1.msra.mxu0 1.0
    %1229 = vmatprep.subr.mxu0 0.0
    %1230 = vmatpush1.msra.mxu0 1.0
    %1231 = vmatprep.subr.mxu0 0.0
    %1232 = vmatpush1.msra.mxu0 1.0
    %1233 = vmatprep.subr.mxu0 0.0
    %1234 = vmatpush1.msra.mxu0 1.0
    %1235 = vmatprep.subr.mxu0 0.0
    %1236 = vmatpush1.msra.mxu0 1.0
    %1237 = vmatprep.subr.mxu0 0.0
    %1238 = vmatpush1.msra.mxu0 1.0
    %1239 = vmatprep.subr.mxu0 0.0
    %1240 = vmatpush1.msra.mxu0 1.0
    %1241 = vmatprep.subr.mxu0 0.0
    %1242 = vmatpush1.msra.mxu0 1.0
    %1243 = vmatprep.subr.mxu0 0.0
    %1244 = vmatpush1.msra.mxu0 1.0
    %1245 = vmatprep.subr.mxu0 0.0
    %1246 = vmatpush1.msra.mxu0 1.0
    %1247 = vmatprep.subr.mxu0 0.0
    %1248 = vmatpush1.msra.mxu0 1.0
    %1249 = vmatprep.subr.mxu0 0.0
    %1250 = vmatpush1.msra.mxu0 0.0
    %1251 = vmatprep.subr.mxu0 0.0
    %1252 = vmatpush1.msra.mxu0 0.0
    %1253 = vmatprep.subr.mxu0 0.0
    %1254 = vmatpush1.msra.mxu0 0.0
    %1255 = vmatprep.subr.mxu0 0.0
    %1256 = vmatpush1.msra.mxu0 0.0
    %1257 = vmatprep.subr.mxu0 0.0
    %1258 = vmatpush1.msra.mxu0 0.0
    %1259 = vmatprep.subr.mxu0 0.0
    %1260 = vmatpush1.msra.mxu0 0.0
    %1261 = vmatprep.subr.mxu0 0.0
    %1262 = vmatpush1.msra.mxu0 0.0
    %1263 = vmatprep.subr.mxu0 0.0
    %1264 = vmatpush1.msra.mxu0 0.0
    %1265 = vmatprep.subr.mxu0 0.0
    %1266 = vmatpush1.msra.mxu0 0.0
    %1267 = vmatprep.subr.mxu0 0.0
    %1268 = vmatpush1.msra.mxu0 0.0
    %1269 = vmatprep.subr.mxu0 0.0
    %1270 = vmatpush1.msra.mxu0 0.0
    %1271 = vmatprep.subr.mxu0 0.0
    %1272 = vmatpush1.msra.mxu0 0.0
    %1273 = vmatprep.subr.mxu0 0.0
    %1274 = vmatpush1.msra.mxu0 0.0
    %1275 = vmatprep.subr.mxu0 0.0
    %1276 = vmatpush1.msra.mxu0 0.0
    %1277 = vmatprep.subr.mxu0 0.0
    %1278 = vmatpush1.msra.mxu0 0.0
    %1279 = vmatprep.subr.mxu0 0.0
    %1280 = vmatpush1.msra.mxu0 0.0
    %1281 = vmatprep.mubr.f32.mxu0 0.0
    %1282 = vmatmul.mubr.f32.gmra.mrb[0].mxu0 %v1199
    %v1283 = vpop.f32.mrb[0].mxu0
    %v1284 = vadd.f32 0.0, %v1283
    %v1285 = vpop.f32.mrb[0].mxu0
    %1286 = vmatprep.mubr.f32.mxu0 0.0
    %1287 = vmatmul.mubr.f32.gmra.mrb[0].mxu0 %v1204
    %v1288 = vpop.f32.mrb[0].mxu0
    %v1289 = vadd.f32 0.0, %v1288
    %v1290 = vpop.f32.mrb[0].mxu0
    %1291 = vmatprep.mubr.f32.mxu0 0.0
    %1292 = vmatmul.mubr.f32.gmra.mrb[0].mxu0 %v1209
    %v1293 = vpop.f32.mrb[0].mxu0
    %v1294 = vadd.f32 0.0, %v1293
    %v1295 = vpop.f32.mrb[0].mxu0
    %1296 = vmatprep.mubr.f32.mxu0 0.0
    %1297 = vmatmul.mubr.f32.gmra.mrb[0].mxu0 %v1214
    %v1298 = vpop.f32.mrb[0].mxu0
    %v1299 = vadd.f32 0.0, %v1298
    %v1300 = vpop.f32.mrb[0].mxu0
    %1301 = vdwg.mxu0
    %v1302 = vmul.f32 %v1284, 0.0078125
    %v1303 = vmul.f32 %v1289, 0.0078125
    %v1304 = vmul.f32 %v1294, 0.0078125
    %v1305 = vmul.f32 %v1299, 0.0078125
    %1307 = vset.pattern.permute.xlu0 0
    %1308 = vperm.xlu0 %1307, %v1302
    %v1309 = vpop.permute.xlu0 %1308
    %1312 = vset.pattern.permute.xlu0 0
    %1313 = vperm.xlu0 %1312, %v1303
    %v1314 = vpop.permute.xlu0 %1313
    %1317 = vset.pattern.permute.xlu0 0
    %1318 = vperm.xlu0 %1317, %v1304
    %v1319 = vpop.permute.xlu0 %1318
    %1322 = vset.pattern.permute.xlu0 0
    %1323 = vperm.xlu0 %1322, %v1305
    %v1324 = vpop.permute.xlu0 %1323
    %v1326 = vsub.f32 %v1199, %v1309
    %v1327 = vsub.f32 %v1204, %v1314
    %v1328 = vsub.f32 %v1209, %v1319
    %v1329 = vsub.f32 %v1214, %v1324
    %v1330 = vmul.f32 %v1326, %v1326
    %v1331 = vmul.f32 %v1327, %v1327
    %v1332 = vmul.f32 %v1328, %v1328
    %v1333 = vmul.f32 %v1329, %v1329
    %1334 = vmatprep.subr.mxu0 0.0
    %1335 = vmatpush1.msra.mxu0 1.0
    %1336 = vmatprep.subr.mxu0 0.0
    %1337 = vmatpush1.msra.mxu0 1.0
    %1338 = vmatprep.subr.mxu0 0.0
    %1339 = vmatpush1.msra.mxu0 1.0
    %1340 = vmatprep.subr.mxu0 0.0
    %1341 = vmatpush1.msra.mxu0 1.0
    %1342 = vmatprep.subr.mxu0 0.0
    %1343 = vmatpush1.msra.mxu0 1.0
    %1344 = vmatprep.subr.mxu0 0.0
    %1345 = vmatpush1.msra.mxu0 1.0
    %1346 = vmatprep.subr.mxu0 0.0
    %1347 = vmatpush1.msra.mxu0 1.0
    %1348 = vmatprep.subr.mxu0 0.0
    %1349 = vmatpush1.msra.mxu0 1.0
    %1350 = vmatprep.subr.mxu0 0.0
    %1351 = vmatpush1.msra.mxu0 1.0
    %1352 = vmatprep.subr.mxu0 0.0
    %1353 = vmatpush1.msra.mxu0 1.0
    %1354 = vmatprep.subr.mxu0 0.0
    %1355 = vmatpush1.msra.mxu0 1.0
    %1356 = vmatprep.subr.mxu0 0.0
    %1357 = vmatpush1.msra.mxu0 1.0
    %1358 = vmatprep.subr.mxu0 0.0
    %1359 = vmatpush1.msra.mxu0 1.0
    %1360 = vmatprep.subr.mxu0 0.0
    %1361 = vmatpush1.msra.mxu0 1.0
    %1362 = vmatprep.subr.mxu0 0.0
    %1363 = vmatpush1.msra.mxu0 1.0
    %1364 = vmatprep.subr.mxu0 0.0
    %1365 = vmatpush1.msra.mxu0 1.0
    %1366 = vmatprep.subr.mxu0 0.0
    %1367 = vmatpush1.msra.mxu0 0.0
    %1368 = vmatprep.subr.mxu0 0.0
    %1369 = vmatpush1.msra.mxu0 0.0
    %1370 = vmatprep.subr.mxu0 0.0
    %1371 = vmatpush1.msra.mxu0 0.0
    %1372 = vmatprep.subr.mxu0 0.0
    %1373 = vmatpush1.msra.mxu0 0.0
    %1374 = vmatprep.subr.mxu0 0.0
    %1375 = vmatpush1.msra.mxu0 0.0
    %1376 = vmatprep.subr.mxu0 0.0
    %1377 = vmatpush1.msra.mxu0 0.0
    %1378 = vmatprep.subr.mxu0 0.0
    %1379 = vmatpush1.msra.mxu0 0.0
    %1380 = vmatprep.subr.mxu0 0.0
    %1381 = vmatpush1.msra.mxu0 0.0
    %1382 = vmatprep.subr.mxu0 0.0
    %1383 = vmatpush1.msra.mxu0 0.0
    %1384 = vmatprep.subr.mxu0 0.0
    %1385 = vmatpush1.msra.mxu0 0.0
    %1386 = vmatprep.subr.mxu0 0.0
    %1387 = vmatpush1.msra.mxu0 0.0
    %1388 = vmatprep.subr.mxu0 0.0
    %1389 = vmatpush1.msra.mxu0 0.0
    %1390 = vmatprep.subr.mxu0 0.0
    %1391 = vmatpush1.msra.mxu0 0.0
    %1392 = vmatprep.subr.mxu0 0.0
    %1393 = vmatpush1.msra.mxu0 0.0
    %1394 = vmatprep.subr.mxu0 0.0
    %1395 = vmatpush1.msra.mxu0 0.0
    %1396 = vmatprep.subr.mxu0 0.0
    %1397 = vmatpush1.msra.mxu0 0.0
    %1398 = vmatprep.mubr.f32.mxu0 0.0
    %1399 = vmatmul.mubr.f32.gmra.mrb[0].mxu0 %v1330
    %v1400 = vpop.f32.mrb[0].mxu0
    %v1401 = vadd.f32 0.0, %v1400
    %v1402 = vpop.f32.mrb[0].mxu0
    %1403 = vmatprep.mubr.f32.mxu0 0.0
    %1404 = vmatmul.mubr.f32.gmra.mrb[0].mxu0 %v1331
    %v1405 = vpop.f32.mrb[0].mxu0
    %v1406 = vadd.f32 0.0, %v1405
    %v1407 = vpop.f32.mrb[0].mxu0
    %1408 = vmatprep.mubr.f32.mxu0 0.0
    %1409 = vmatmul.mubr.f32.gmra.mrb[0].mxu0 %v1332
    %v1410 = vpop.f32.mrb[0].mxu0
    %v1411 = vadd.f32 0.0, %v1410
    %v1412 = vpop.f32.mrb[0].mxu0
    %1413 = vmatprep.mubr.f32.mxu0 0.0
    %1414 = vmatmul.mubr.f32.gmra.mrb[0].mxu0 %v1333
    %v1415 = vpop.f32.mrb[0].mxu0
    %v1416 = vadd.f32 0.0, %v1415
    %v1417 = vpop.f32.mrb[0].mxu0
    %1418 = vdwg.mxu0
    %v1419 = vmul.f32 %v1401, 0.0078125
    %v1420 = vmul.f32 %v1406, 0.0078125
    %v1421 = vmul.f32 %v1411, 0.0078125
    %v1422 = vmul.f32 %v1416, 0.0078125
    %v1423 = vadd.f32 %v1419, 1e-05
    %v1424 = vadd.f32 %v1420, 1e-05
    %v1425 = vadd.f32 %v1421, 1e-05
    %v1426 = vadd.f32 %v1422, 1e-05
    %v1427 = vrsqrt.pop %v1423
    %v1428 = vrsqrt.pop %v1424
    %v1429 = vrsqrt.pop %v1425
    %v1430 = vrsqrt.pop %v1426
    %1435 = vrot.lane.b32.xlu0 %v1427, 2
    %v1436 = vpop.permute.xlu0 %1435
    %1437 = vrot.lane.b32.xlu0 %v1428, 2
    %v1438 = vpop.permute.xlu0 %1437
    %1439 = vrot.lane.b32.xlu0 %v1429, 2
    %v1440 = vpop.permute.xlu0 %1439
    %1441 = vrot.lane.b32.xlu0 %v1430, 2
    %v1442 = vpop.permute.xlu0 %1441
    %v1447 = vmul.f32 %v481, %v1436
    %v1448 = vmul.f32 %v482, %v1438
    %v1449 = vmul.f32 %v483, %v1440
    %v1450 = vmul.f32 %v484, %v1442
    %1452 = vset.pattern.permute.xlu0 2
    %1453 = vperm.xlu0 %1452, %v1447
    %v1454 = vpop.permute.xlu0 %1453
    %1457 = vset.pattern.permute.xlu0 2
    %1458 = vperm.xlu0 %1457, %v1448
    %v1459 = vpop.permute.xlu0 %1458
    %1462 = vset.pattern.permute.xlu0 2
    %1463 = vperm.xlu0 %1462, %v1449
    %v1464 = vpop.permute.xlu0 %1463
    %1467 = vset.pattern.permute.xlu0 2
    %1468 = vperm.xlu0 %1467, %v1450
    %v1469 = vpop.permute.xlu0 %1468
    %v1471 = vmul.f32 %v1326, %v1454
    %v1472 = vmul.f32 %v1327, %v1459
    %v1473 = vmul.f32 %v1328, %v1464
    %v1474 = vmul.f32 %v1329, %v1469
    %1475 = vset.pattern.permute.xlu0 2
    %1476 = vperm.xlu0 %1475, %v521
    %v1477 = vpop.permute.xlu0 %1476
    %1479 = vset.pattern.permute.xlu0 2
    %1480 = vperm.xlu0 %1479, %v522
    %v1481 = vpop.permute.xlu0 %1480
    %1483 = vset.pattern.permute.xlu0 2
    %1484 = vperm.xlu0 %1483, %v523
    %v1485 = vpop.permute.xlu0 %1484
    %1487 = vset.pattern.permute.xlu0 2
    %1488 = vperm.xlu0 %1487, %v524
    %v1489 = vpop.permute.xlu0 %1488
    %v1491 = vadd.f32 %v1471, %v1477
    %v1492 = vadd.f32 %v1472, %v1481
    %v1493 = vadd.f32 %v1473, %v1485
    %v1494 = vadd.f32 %v1474, %v1489
    %v1495 = vmax.f32 %v1491, 0.0
    %v1496 = vmax.f32 %v1492, 0.0
    %v1497 = vmax.f32 %v1493, 0.0
    %v1498 = vmax.f32 %v1494, 0.0
    %v1499 = vadd.f32 %v1495, %v1026
    %v1500 = vadd.f32 %v1496, %v1027
    %v1501 = vadd.f32 %v1497, %v1028
    %v1502 = vadd.f32 %v1498, %v1029
    %v1503 = vld [vmem:[#allocation7] sm:$0xff]
    %v1504 = vld [vmem:[#allocation7 + $0x8] sm:$0xff]
    %v1505 = vld [vmem:[%s6] sm:$0xff]
    %v1506 = vld [vmem:[%s6 + $0x8] sm:$0xff]
    %1508 = vset.pattern.permute.xlu0 0
    %1509 = vperm.xlu0 %1508, %v1505
    %v1510 = vpop.permute.xlu0 %1509
    %1513 = vset.pattern.permute.xlu0 0
    %1514 = vperm.xlu0 %1513, %v1506
    %v1515 = vpop.permute.xlu0 %1514
    %v1518 = vsel %vm76, %v1503, 0
    %v1521 = vsel %vm76, %v1504, 0
    %1523 = vmatprep.subr.mxu0 0.0
    %1524 = vmatpush1.msra.mxu0 %v1499
    %1525 = vmatprep.subr.mxu0 0.0
    %1526 = vmatpush1.msra.mxu0 %v1500
    %1527 = vmatprep.subr.mxu0 0.0
    %1528 = vmatpush1.msra.mxu0 %v1501
    %1529 = vmatprep.subr.mxu0 0.0
    %1530 = vmatpush1.msra.mxu0 %v1502
    %1531 = vmatprep.subr.mxu0 0.0
    %1532 = vmatpush1.msra.mxu0 0.0
    %1533 = vmatprep.subr.mxu0 0.0
    %1534 = vmatpush1.msra.mxu0 0.0
    %1535 = vmatprep.subr.mxu0 0.0
    %1536 = vmatpush1.msra.mxu0 0.0
    %1537 = vmatprep.subr.mxu0 0.0
    %1538 = vmatpush1.msra.mxu0 0.0
    %1539 = vmatprep.subr.mxu0 0.0
    %1540 = vmatpush1.msra.mxu0 0.0
    %1541 = vmatprep.subr.mxu0 0.0
    %1542 = vmatpush1.msra.mxu0 0.0
    %1543 = vmatprep.subr.mxu0 0.0
    %1544 = vmatpush1.msra.mxu0 0.0
    %1545 = vmatprep.subr.mxu0 0.0
    %1546 = vmatpush1.msra.mxu0 0.0
    %1547 = vmatprep.subr.mxu0 0.0
    %1548 = vmatpush1.msra.mxu0 0.0
    %1549 = vmatprep.subr.mxu0 0.0
    %1550 = vmatpush1.msra.mxu0 0.0
    %1551 = vmatprep.subr.mxu0 0.0
    %1552 = vmatpush1.msra.mxu0 0.0
    %1553 = vmatprep.subr.mxu0 0.0
    %1554 = vmatpush1.msra.mxu0 0.0
    %1555 = vmatprep.subr.mxu0 0.0
    %1556 = vmatpush1.msra.mxu0 0.0
    %1557 = vmatprep.subr.mxu0 0.0
    %1558 = vmatpush1.msra.mxu0 0.0
    %1559 = vmatprep.subr.mxu0 0.0
    %1560 = vmatpush1.msra.mxu0 0.0
    %1561 = vmatprep.subr.mxu0 0.0
    %1562 = vmatpush1.msra.mxu0 0.0
    %1563 = vmatprep.subr.mxu0 0.0
    %1564 = vmatpush1.msra.mxu0 0.0
    %1565 = vmatprep.subr.mxu0 0.0
    %1566 = vmatpush1.msra.mxu0 0.0
    %1567 = vmatprep.subr.mxu0 0.0
    %1568 = vmatpush1.msra.mxu0 0.0
    %1569 = vmatprep.subr.mxu0 0.0
    %1570 = vmatpush1.msra.mxu0 0.0
    %1571 = vmatprep.subr.mxu0 0.0
    %1572 = vmatpush1.msra.mxu0 0.0
    %1573 = vmatprep.subr.mxu0 0.0
    %1574 = vmatpush1.msra.mxu0 0.0
    %1575 = vmatprep.subr.mxu0 0.0
    %1576 = vmatpush1.msra.mxu0 0.0
    %1577 = vmatprep.subr.mxu0 0.0
    %1578 = vmatpush1.msra.mxu0 0.0
    %1579 = vmatprep.subr.mxu0 0.0
    %1580 = vmatpush1.msra.mxu0 0.0
    %1581 = vmatprep.subr.mxu0 0.0
    %1582 = vmatpush1.msra.mxu0 0.0
    %1583 = vmatprep.subr.mxu0 0.0
    %1584 = vmatpush1.msra.mxu0 0.0
    %1585 = vmatprep.subr.mxu0 0.0
    %1586 = vmatpush1.msra.mxu0 0.0
    %1587 = vmatprep.mubr.f32.mxu0 0.0
    %1588 = vmatmul.mubr.f32.gmra.mrb[0].mxu0 %v1518
    %v1589 = vpop.f32.mrb[0].mxu0
    %v1590 = vadd.f32 %v1510, %v1589
    %v1591 = vpop.f32.mrb[0].mxu0
    %1592 = vmatprep.mubr.f32.mxu0 0.0
    %1593 = vmatmul.mubr.f32.gmra.mrb[0].mxu0 %v1521
    %v1594 = vpop.f32.mrb[0].mxu0
    %v1595 = vadd.f32 %v1515, %v1594
    %v1596 = vpop.f32.mrb[0].mxu0
    %1597 = vdwg.mxu0
    %1598 = vst [vmem:[#allocation8] sm:$0xff] %v1590
    %1599 = vst [vmem:[#allocation8 + $0x8] sm:$0xff] %v1595
    // Predicated region
    $region42: #{tpu_custom_call.1} parent=1 // pred_check
      _
    $region43: #{tpu_custom_call.1} parent=1 // pred_check_branch
      %1601 = sbr.rel (0) target = $region45
    $region44: #{tpu_custom_call.1} parent=1 // pred_region
      %s1603 = ssub.s32 256, 256
      %1604 = vsyncadd [#allocation4], %s1603
      %s1605 = sshll.u32 [#allocation8], 4
      %s1606 = int_to_ptr.vmem [resolvable:$true] %s1605
      %1611 = dma.vmem_to_hbm [thread:$0]  %s1606, 256, %s7, [#allocation4], 128, 128, 8
    $region45: #{tpu_custom_call.1} parent=1 // pred_fallthru
      _
    // Predicated region
    $region46: #{tpu_custom_call.1} parent=1 // pred_check
      _
    $region47: #{tpu_custom_call.1} parent=1 // pred_check_branch
      %1613 = sbr.rel (0) target = $region49
    $region48: #{tpu_custom_call.1} parent=1 // pred_region
      %1614 = dma.done [#allocation4], 256
    $region49: #{tpu_custom_call.1} parent=1 // pred_fallthru
      _
    %1615 = vsyncpa [#allocation3], 1
    %1616 = vsyncpa [#allocation6], 1
    %1617 = vsyncpa [#allocation4], 1

</llo_original>
